<compile_context>
chip_gen: v7x
topology: tpu7x:2x2x1
jax: 0.10.0
libtpu: 0.0.40
codegen_flags: <defaults>
</compile_context>

<pallas_src>
import functools

import jax
import jax.numpy as jnp
from jax import lax
from jax.experimental import pallas as pl
from jax.experimental.pallas import tpu as pltpu


# ---------------------------------------------------------------------------
# Kernel 1: Conv1d-as-matmul + 5 x (LayerNorm, ReLU, Linear) encoder stack.
# Grid: (B,), one batch element per step; weights resident across the grid.
# ---------------------------------------------------------------------------
def _conv_encoder_kernel(x_ref,        # (1, To+1, 2*Cin)  f32  padded, pair-folded input
                         wc_ref,       # (4*Cin, C)        bf16 flattened conv weight
                         ln_g_ref,     # (5, C)            f32
                         ln_b_ref,     # (5, C)            f32
                         w_mid_ref,    # (4, C, C)         bf16
                         w_last_ref,   # (C, Z)            bf16
                         b_last_ref,   # (1, Z)            f32
                         out_ref):     # (1, To, Z)        f32
    to = out_ref.shape[1]

    xp = x_ref[0]                                                       # (To+1, 2*Cin)
    # im2col row r = [x_pad[2r] | x_pad[2r+1] | x_pad[2r+2] | x_pad[2r+3]]
    im2col = jnp.concatenate([xp[0:to, :], xp[1:to + 1, :]], axis=-1)   # (To, 4*Cin)

    # Conv1d(kernel=4, stride=2, pad=1, bias=False) == im2col @ Wc
    h = jnp.dot(im2col.astype(jnp.bfloat16), wc_ref[...],
                preferred_element_type=jnp.float32)                    # (To, C)

    def ln_relu(v, g, b):
        mu = jnp.mean(v, axis=-1, keepdims=True)
        d = v - mu
        var = jnp.mean(d * d, axis=-1, keepdims=True)
        y = d * lax.rsqrt(var + 1e-5) * g + b
        return jnp.maximum(y, 0.0)

    for i in range(4):  # LayerNorm, ReLU, Linear(C, C, bias=False)
        y = ln_relu(h, ln_g_ref[i:i + 1, :], ln_b_ref[i:i + 1, :])
        h = jnp.dot(y.astype(jnp.bfloat16), w_mid_ref[i],
                    preferred_element_type=jnp.float32)

    # final LayerNorm, ReLU, Linear(C, z_dim) (with bias)
    y = ln_relu(h, ln_g_ref[4:5, :], ln_b_ref[4:5, :])
    z = jnp.dot(y.astype(jnp.bfloat16), w_last_ref[...],
                preferred_element_type=jnp.float32) + b_last_ref[...]
    out_ref[0] = z


# ---------------------------------------------------------------------------
# Kernel 2: VQEmbeddingEMA forward (inference path): nearest-code quantization,
# straight-through forward value, commitment loss.
# ---------------------------------------------------------------------------
def _vq_kernel(z_ref,        # (B, To, D) f32
               emb_ref,      # (M, D)     f32
               q_ref,        # (B, To, D) f32  out: quantized
               loss_ref,     # (1, 1)     f32  out: commitment loss
               *, loss_scale):
    b, t, d = z_ref.shape
    m = emb_ref.shape[0]

    zf = z_ref[...].reshape(b * t, d)
    e = emb_ref[...]

    z_sq = jnp.sum(zf * zf, axis=-1, keepdims=True)                     # (BT, 1)
    e_sq = lax.dot_general(jnp.ones((1, d), jnp.float32), e * e,
                           (((1,), (1,)), ((), ())),
                           preferred_element_type=jnp.float32)          # (1, M)
    cross = lax.dot_general(zf, e, (((1,), (1,)), ((), ())),
                            preferred_element_type=jnp.float32)         # (BT, M)
    dist = z_sq + e_sq - 2.0 * cross                                    # (BT, M)

    # argmin with first-occurrence tie-break, built from min/where (2-D only)
    iota = lax.broadcasted_iota(jnp.int32, (b * t, m), 1)
    is_min = dist <= jnp.min(dist, axis=-1, keepdims=True)
    first = jnp.min(jnp.where(is_min, iota, m), axis=-1, keepdims=True)  # (BT, 1)
    onehot = (iota == first).astype(jnp.float32)                         # (BT, M)

    # matmul-gather of the selected codebook rows
    quant = jnp.dot(onehot, e, preferred_element_type=jnp.float32)       # (BT, D)

    diff = zf - quant
    sq = jnp.sum(diff * diff, axis=-1, keepdims=True)                    # (BT, 1)
    loss_ref[...] = loss_scale * jnp.sum(sq, axis=0, keepdims=True)      # (1, 1)

    # straight-through estimator: forward value of x + (q - x).detach() == q
    q_ref[...] = quant.reshape(b, t, d)


# ---------------------------------------------------------------------------
# Kernel 3: single-layer LSTM (batch_first) with the whole time loop inside one
# pallas_call. Gates use a single fused matmul on [x_t | h_{t-1}].
# ---------------------------------------------------------------------------
def _lstm_kernel(z_ref,     # (1, B, D)   f32  time-major input slice
                 w_ref,     # (D+H, 4H)   bf16 fused [W_ih.T ; W_hh.T]
                 b_ref,     # (1, 4H)     f32  b_ih + b_hh
                 out_ref,   # (1, B, H)   f32
                 h_scr,     # (B, H)      f32  VMEM state
                 c_scr):    # (B, H)      f32  VMEM state
    t = pl.program_id(0)
    hd = h_scr.shape[-1]

    @pl.when(t == 0)
    def _():
        h_scr[...] = jnp.zeros_like(h_scr)
        c_scr[...] = jnp.zeros_like(c_scr)

    xh = jnp.concatenate([z_ref[0], h_scr[...]], axis=-1)                # (B, D+H)
    gates = jnp.dot(xh.astype(jnp.bfloat16), w_ref[...],
                    preferred_element_type=jnp.float32) + b_ref[...]     # (B, 4H)

    i = jax.nn.sigmoid(gates[:, 0:hd])
    f = jax.nn.sigmoid(gates[:, hd:2 * hd])
    g = jnp.tanh(gates[:, 2 * hd:3 * hd])
    o = jax.nn.sigmoid(gates[:, 3 * hd:4 * hd])

    c_new = f * c_scr[...] + i * g
    h_new = o * jnp.tanh(c_new)
    c_scr[...] = c_new
    h_scr[...] = h_new
    out_ref[0] = h_new


# ---------------------------------------------------------------------------
# Wrapper
# ---------------------------------------------------------------------------
def vqcpc_encoder_forward(mels, params, commitment_cost=0.25):
    B, Cin, T = mels.shape
    To = T // 2
    C = params["ln_gamma"].shape[1]
    Z = params["w_last"].shape[1]
    H = params["lstm_b"].shape[1] // 4

    # Layout plumbing for the strided conv: pad time by 1 each side and fold the
    # stride-2 frame pairs into lanes (pure transpose/pad/reshape, no compute).
    x = jnp.transpose(mels, (0, 2, 1))                       # (B, T, Cin)
    x = jnp.pad(x, ((0, 0), (1, 1), (0, 0)))                 # (B, T+2, Cin)
    x = x.reshape(B, To + 1, 2 * Cin)                        # (B, To+1, 2*Cin)

    conv_enc = pl.pallas_call(
        _conv_encoder_kernel,
        out_shape=jax.ShapeDtypeStruct((B, To, Z), jnp.float32),
        grid_spec=pltpu.PrefetchScalarGridSpec(
            num_scalar_prefetch=0,
            grid=(B,),
            in_specs=[
                pl.BlockSpec((1, To + 1, 2 * Cin), lambda b: (b, 0, 0)),
                pl.BlockSpec((4 * Cin, C), lambda b: (0, 0)),
                pl.BlockSpec((5, C), lambda b: (0, 0)),
                pl.BlockSpec((5, C), lambda b: (0, 0)),
                pl.BlockSpec((4, C, C), lambda b: (0, 0, 0)),
                pl.BlockSpec((C, Z), lambda b: (0, 0)),
                pl.BlockSpec((1, Z), lambda b: (0, 0)),
            ],
            out_specs=pl.BlockSpec((1, To, Z), lambda b: (b, 0, 0)),
        ),
        compiler_params=pltpu.CompilerParams(dimension_semantics=("parallel",)),
    )
    z_enc = conv_enc(x, params["conv_w"], params["ln_gamma"], params["ln_beta"],
                     params["w_mid"], params["w_last"], params["b_last"])

    # VQ codebook lookup + commitment loss (single shot, everything fits VMEM).
    loss_scale = commitment_cost / float(B * To * Z)
    vmem = pl.BlockSpec(memory_space=pltpu.MemorySpace.VMEM)
    vq = pl.pallas_call(
        functools.partial(_vq_kernel, loss_scale=loss_scale),
        out_shape=(jax.ShapeDtypeStruct((B, To, Z), jnp.float32),
                   jax.ShapeDtypeStruct((1, 1), jnp.float32)),
        in_specs=[vmem, vmem],
        out_specs=(vmem, vmem),
    )
    quantized, loss = vq(z_enc, params["codebook"])
    # TODO(synk): training-mode EMA buffer updates (ema_count / ema_weight /
    # embedding rewrite) are stateful and not part of this inference forward.

    # LSTM over time, time-major layout so every block is lane/sublane-full.
    z_t = jnp.transpose(quantized, (1, 0, 2))                # (To, B, Z)
    lstm = pl.pallas_call(
        _lstm_kernel,
        out_shape=jax.ShapeDtypeStruct((To, B, H), jnp.float32),
        grid_spec=pltpu.PrefetchScalarGridSpec(
            num_scalar_prefetch=0,
            grid=(To,),
            in_specs=[
                pl.BlockSpec((1, B, Z), lambda t: (t, 0, 0)),
                pl.BlockSpec((Z + H, 4 * H), lambda t: (0, 0)),
                pl.BlockSpec((1, 4 * H), lambda t: (0, 0)),
            ],
            out_specs=pl.BlockSpec((1, B, H), lambda t: (t, 0, 0)),
            scratch_shapes=[pltpu.VMEM((B, H), jnp.float32),
                            pltpu.VMEM((B, H), jnp.float32)],
        ),
        compiler_params=pltpu.CompilerParams(dimension_semantics=("arbitrary",)),
    )
    c_t = lstm(z_t, params["lstm_w"], params["lstm_b"])
    c = jnp.transpose(c_t, (1, 0, 2))                        # (B, To, H)

    return quantized, c, loss[0, 0]


# ---------------------------------------------------------------------------
# Parameter init mirroring the PyTorch module's layer shapes / defaults.
# ---------------------------------------------------------------------------
def init_params(key, in_channels, channels, n_embeddings, z_dim, c_dim):
    ks = jax.random.split(key, 9)
    K = 4

    cb = (in_channels * K) ** -0.5
    conv_w = jax.random.uniform(ks[0], (channels, in_channels, K),
                                minval=-cb, maxval=cb, dtype=jnp.float32)
    # fold to (K*Cin, C) matmul layout matching the in-kernel im2col ordering
    conv_w_flat = jnp.transpose(conv_w, (2, 1, 0)).reshape(K * in_channels, channels)

    lb = channels ** -0.5
    w_mid = jax.random.uniform(ks[1], (4, channels, channels),
                               minval=-lb, maxval=lb, dtype=jnp.float32)
    w_last = jax.random.uniform(ks[2], (channels, z_dim),
                                minval=-lb, maxval=lb, dtype=jnp.float32)
    b_last = jax.random.uniform(ks[3], (1, z_dim),
                                minval=-lb, maxval=lb, dtype=jnp.float32)

    codebook = jax.random.uniform(ks[4], (n_embeddings, z_dim),
                                  minval=-1.0 / 512, maxval=1.0 / 512,
                                  dtype=jnp.float32)

    hb = c_dim ** -0.5
    w_ih = jax.random.uniform(ks[5], (4 * c_dim, z_dim), minval=-hb, maxval=hb,
                              dtype=jnp.float32)
    w_hh = jax.random.uniform(ks[6], (4 * c_dim, c_dim), minval=-hb, maxval=hb,
                              dtype=jnp.float32)
    b_ih = jax.random.uniform(ks[7], (4 * c_dim,), minval=-hb, maxval=hb,
                              dtype=jnp.float32)
    b_hh = jax.random.uniform(ks[8], (4 * c_dim,), minval=-hb, maxval=hb,
                              dtype=jnp.float32)
    lstm_w = jnp.concatenate([w_ih.T, w_hh.T], axis=0)       # (Z+H, 4H), fused gates
    lstm_b = (b_ih + b_hh).reshape(1, 4 * c_dim)

    return {
        "conv_w": conv_w_flat.astype(jnp.bfloat16),
        "ln_gamma": jnp.ones((5, channels), jnp.float32),
        "ln_beta": jnp.zeros((5, channels), jnp.float32),
        "w_mid": w_mid.astype(jnp.bfloat16),
        "w_last": w_last.astype(jnp.bfloat16),
        "b_last": b_last,
        "codebook": codebook,
        "lstm_w": lstm_w.astype(jnp.bfloat16),
        "lstm_b": lstm_b,
    }


if __name__ == "__main__":
    # Small, lane-dense test shapes: batch=2, mel channels=16, frames=64,
    # channels = n_embeddings = z_dim = c_dim = 128.
    B, Cin, T = 2, 16, 64
    C, M, Z, H = 128, 128, 128, 128

    key = jax.random.PRNGKey(0)
    k_params, k_x = jax.random.split(key)
    params = init_params(k_params, Cin, C, M, Z, H)
    mels = jax.random.normal(k_x, (B, Cin, T), dtype=jnp.float32)

    z, c, loss = vqcpc_encoder_forward(mels, params)
    jax.block_until_ready((z, c, loss))

    To = T // 2
    assert z.shape == (B, To, Z) and c.shape == (B, To, H) and loss.shape == ()
    assert bool(jnp.isfinite(loss))
    assert bool(jnp.all(jnp.isfinite(z))) and bool(jnp.all(jnp.isfinite(c)))
    print("KERNEL_OK")
</pallas_src>

<mosaic_0001>
module attributes {stable_mosaic.version = 11 : i64} {
  func.func @_conv_encoder_kernel(%arg0: i32, %arg1: memref<1x33x32xf32, #tpu.memory_space<vmem>>, %arg2: memref<64x128xbf16, #tpu.memory_space<vmem>>, %arg3: memref<5x128xf32, #tpu.memory_space<vmem>>, %arg4: memref<5x128xf32, #tpu.memory_space<vmem>>, %arg5: memref<4x128x128xbf16, #tpu.memory_space<vmem>>, %arg6: memref<128x128xbf16, #tpu.memory_space<vmem>>, %arg7: memref<1x128xf32, #tpu.memory_space<vmem>>, %arg8: memref<1x32x128xf32, #tpu.memory_space<vmem>>) attributes {dimension_semantics = [#tpu.dimension_semantics<parallel>], iteration_bounds = array<i64: 2>, scalar_prefetch = 0 : i64, scratch_operands = 0 : i64, tpu.core_type = #tpu.core_type<tc>, window_params = [{transform_indices = @transform_0, window_bounds = array<i64: 1, 33, 32>}, {pipeline_mode = #tpu.pipeline_mode<synchronous>, transform_indices = @transform_1, window_bounds = array<i64: 64, 128>}, {pipeline_mode = #tpu.pipeline_mode<synchronous>, transform_indices = @transform_2, window_bounds = array<i64: 5, 128>}, {pipeline_mode = #tpu.pipeline_mode<synchronous>, transform_indices = @transform_3, window_bounds = array<i64: 5, 128>}, {pipeline_mode = #tpu.pipeline_mode<synchronous>, transform_indices = @transform_4, window_bounds = array<i64: 4, 128, 128>}, {pipeline_mode = #tpu.pipeline_mode<synchronous>, transform_indices = @transform_5, window_bounds = array<i64: 128, 128>}, {pipeline_mode = #tpu.pipeline_mode<synchronous>, transform_indices = @transform_6, window_bounds = array<i64: 1, 128>}, {transform_indices = @transform_7, window_bounds = array<i64: 1, 32, 128>}]} {
    %c0 = arith.constant 0 : index
    %c0_0 = arith.constant 0 : index
    %c0_1 = arith.constant 0 : index
    %0 = vector.load %arg1[%c0, %c0_0, %c0_1] : memref<1x33x32xf32, #tpu.memory_space<vmem>>, vector<1x33x32xf32>
    %1 = vector.shape_cast %0 : vector<1x33x32xf32> to vector<33x32xf32>
    %2 = vector.extract_strided_slice %1 {offsets = [0, 0], sizes = [32, 32], strides = [1, 1]} : vector<33x32xf32> to vector<32x32xf32>
    %3 = vector.extract_strided_slice %1 {offsets = [1, 0], sizes = [32, 32], strides = [1, 1]} : vector<33x32xf32> to vector<32x32xf32>
    %4 = tpu.concatenate %2, %3 in 1 : vector<32x32xf32>, vector<32x32xf32> -> vector<32x64xf32>
    %5 = arith.truncf %4 : vector<32x64xf32> to vector<32x64xbf16>
    %c0_2 = arith.constant 0 : index
    %c0_3 = arith.constant 0 : index
    %6 = vector.load %arg2[%c0_2, %c0_3] : memref<64x128xbf16, #tpu.memory_space<vmem>>, vector<64x128xbf16>
    %cst = arith.constant dense<0.000000e+00> : vector<32x128xf32>
    %7 = tpu.matmul %5, %6, %cst {dimension_numbers = #tpu.dot_dimension_numbers<[1], [0], [0], [1], [0, 0, 1, 1], [], []>} : vector<32x64xbf16>, vector<64x128xbf16>, vector<32x128xf32> -> vector<32x128xf32>
    %c0_4 = arith.constant 0 : index
    %c0_5 = arith.constant 0 : index
    %8 = vector.load %arg3[%c0_4, %c0_5] : memref<5x128xf32, #tpu.memory_space<vmem>>, vector<1x128xf32>
    %c0_6 = arith.constant 0 : index
    %c0_7 = arith.constant 0 : index
    %9 = vector.load %arg4[%c0_6, %c0_7] : memref<5x128xf32, #tpu.memory_space<vmem>>, vector<1x128xf32>
    %cst_8 = arith.constant dense<0.000000e+00> : vector<32xf32>
    %10 = vector.multi_reduction <add>, %7, %cst_8 [1] : vector<32x128xf32> to vector<32xf32>
    %11 = vector.shape_cast %10 : vector<32xf32> to vector<32x1xf32>
    %cst_9 = arith.constant 1.280000e+02 : f32
    %12 = vector.broadcast %cst_9 : f32 to vector<32x1xf32>
    %13 = arith.divf %11, %12 : vector<32x1xf32>
    %14 = vector.broadcast %13 : vector<32x1xf32> to vector<32x128xf32>
    %15 = arith.subf %7, %14 : vector<32x128xf32>
    %16 = arith.mulf %15, %15 : vector<32x128xf32>
    %cst_10 = arith.constant dense<0.000000e+00> : vector<32xf32>
    %17 = vector.multi_reduction <add>, %16, %cst_10 [1] : vector<32x128xf32> to vector<32xf32>
    %18 = vector.shape_cast %17 : vector<32xf32> to vector<32x1xf32>
    %cst_11 = arith.constant 1.280000e+02 : f32
    %19 = vector.broadcast %cst_11 : f32 to vector<32x1xf32>
    %20 = arith.divf %18, %19 : vector<32x1xf32>
    %cst_12 = arith.constant 9.99999974E-6 : f32
    %21 = vector.broadcast %cst_12 : f32 to vector<32x1xf32>
    %22 = arith.addf %20, %21 : vector<32x1xf32>
    %23 = math.rsqrt %22 : vector<32x1xf32>
    %24 = vector.broadcast %23 : vector<32x1xf32> to vector<32x128xf32>
    %25 = arith.mulf %15, %24 : vector<32x128xf32>
    %26 = vector.broadcast %8 : vector<1x128xf32> to vector<32x128xf32>
    %27 = arith.mulf %25, %26 : vector<32x128xf32>
    %28 = vector.broadcast %9 : vector<1x128xf32> to vector<32x128xf32>
    %29 = arith.addf %27, %28 : vector<32x128xf32>
    %cst_13 = arith.constant 0.000000e+00 : f32
    %30 = vector.broadcast %cst_13 : f32 to vector<32x128xf32>
    %31 = arith.maximumf %29, %30 : vector<32x128xf32>
    %32 = arith.truncf %31 : vector<32x128xf32> to vector<32x128xbf16>
    %c0_14 = arith.constant 0 : index
    %c0_15 = arith.constant 0 : index
    %c0_16 = arith.constant 0 : index
    %33 = vector.load %arg5[%c0_14, %c0_15, %c0_16] : memref<4x128x128xbf16, #tpu.memory_space<vmem>>, vector<1x128x128xbf16>
    %34 = vector.shape_cast %33 : vector<1x128x128xbf16> to vector<128x128xbf16>
    %cst_17 = arith.constant dense<0.000000e+00> : vector<32x128xf32>
    %35 = tpu.matmul %32, %34, %cst_17 {dimension_numbers = #tpu.dot_dimension_numbers<[1], [0], [0], [1], [0, 0, 1, 1], [], []>} : vector<32x128xbf16>, vector<128x128xbf16>, vector<32x128xf32> -> vector<32x128xf32>
    %c1 = arith.constant 1 : index
    %c0_18 = arith.constant 0 : index
    %36 = vector.load %arg3[%c1, %c0_18] : memref<5x128xf32, #tpu.memory_space<vmem>>, vector<1x128xf32>
    %c1_19 = arith.constant 1 : index
    %c0_20 = arith.constant 0 : index
    %37 = vector.load %arg4[%c1_19, %c0_20] : memref<5x128xf32, #tpu.memory_space<vmem>>, vector<1x128xf32>
    %cst_21 = arith.constant dense<0.000000e+00> : vector<32xf32>
    %38 = vector.multi_reduction <add>, %35, %cst_21 [1] : vector<32x128xf32> to vector<32xf32>
    %39 = vector.shape_cast %38 : vector<32xf32> to vector<32x1xf32>
    %cst_22 = arith.constant 1.280000e+02 : f32
    %40 = vector.broadcast %cst_22 : f32 to vector<32x1xf32>
    %41 = arith.divf %39, %40 : vector<32x1xf32>
    %42 = vector.broadcast %41 : vector<32x1xf32> to vector<32x128xf32>
    %43 = arith.subf %35, %42 : vector<32x128xf32>
    %44 = arith.mulf %43, %43 : vector<32x128xf32>
    %cst_23 = arith.constant dense<0.000000e+00> : vector<32xf32>
    %45 = vector.multi_reduction <add>, %44, %cst_23 [1] : vector<32x128xf32> to vector<32xf32>
    %46 = vector.shape_cast %45 : vector<32xf32> to vector<32x1xf32>
    %cst_24 = arith.constant 1.280000e+02 : f32
    %47 = vector.broadcast %cst_24 : f32 to vector<32x1xf32>
    %48 = arith.divf %46, %47 : vector<32x1xf32>
    %cst_25 = arith.constant 9.99999974E-6 : f32
    %49 = vector.broadcast %cst_25 : f32 to vector<32x1xf32>
    %50 = arith.addf %48, %49 : vector<32x1xf32>
    %51 = math.rsqrt %50 : vector<32x1xf32>
    %52 = vector.broadcast %51 : vector<32x1xf32> to vector<32x128xf32>
    %53 = arith.mulf %43, %52 : vector<32x128xf32>
    %54 = vector.broadcast %36 : vector<1x128xf32> to vector<32x128xf32>
    %55 = arith.mulf %53, %54 : vector<32x128xf32>
    %56 = vector.broadcast %37 : vector<1x128xf32> to vector<32x128xf32>
    %57 = arith.addf %55, %56 : vector<32x128xf32>
    %cst_26 = arith.constant 0.000000e+00 : f32
    %58 = vector.broadcast %cst_26 : f32 to vector<32x128xf32>
    %59 = arith.maximumf %57, %58 : vector<32x128xf32>
    %60 = arith.truncf %59 : vector<32x128xf32> to vector<32x128xbf16>
    %c1_27 = arith.constant 1 : index
    %c0_28 = arith.constant 0 : index
    %c0_29 = arith.constant 0 : index
    %61 = vector.load %arg5[%c1_27, %c0_28, %c0_29] : memref<4x128x128xbf16, #tpu.memory_space<vmem>>, vector<1x128x128xbf16>
    %62 = vector.shape_cast %61 : vector<1x128x128xbf16> to vector<128x128xbf16>
    %cst_30 = arith.constant dense<0.000000e+00> : vector<32x128xf32>
    %63 = tpu.matmul %60, %62, %cst_30 {dimension_numbers = #tpu.dot_dimension_numbers<[1], [0], [0], [1], [0, 0, 1, 1], [], []>} : vector<32x128xbf16>, vector<128x128xbf16>, vector<32x128xf32> -> vector<32x128xf32>
    %c2 = arith.constant 2 : index
    %c0_31 = arith.constant 0 : index
    %64 = vector.load %arg3[%c2, %c0_31] : memref<5x128xf32, #tpu.memory_space<vmem>>, vector<1x128xf32>
    %c2_32 = arith.constant 2 : index
    %c0_33 = arith.constant 0 : index
    %65 = vector.load %arg4[%c2_32, %c0_33] : memref<5x128xf32, #tpu.memory_space<vmem>>, vector<1x128xf32>
    %cst_34 = arith.constant dense<0.000000e+00> : vector<32xf32>
    %66 = vector.multi_reduction <add>, %63, %cst_34 [1] : vector<32x128xf32> to vector<32xf32>
    %67 = vector.shape_cast %66 : vector<32xf32> to vector<32x1xf32>
    %cst_35 = arith.constant 1.280000e+02 : f32
    %68 = vector.broadcast %cst_35 : f32 to vector<32x1xf32>
    %69 = arith.divf %67, %68 : vector<32x1xf32>
    %70 = vector.broadcast %69 : vector<32x1xf32> to vector<32x128xf32>
    %71 = arith.subf %63, %70 : vector<32x128xf32>
    %72 = arith.mulf %71, %71 : vector<32x128xf32>
    %cst_36 = arith.constant dense<0.000000e+00> : vector<32xf32>
    %73 = vector.multi_reduction <add>, %72, %cst_36 [1] : vector<32x128xf32> to vector<32xf32>
    %74 = vector.shape_cast %73 : vector<32xf32> to vector<32x1xf32>
    %cst_37 = arith.constant 1.280000e+02 : f32
    %75 = vector.broadcast %cst_37 : f32 to vector<32x1xf32>
    %76 = arith.divf %74, %75 : vector<32x1xf32>
    %cst_38 = arith.constant 9.99999974E-6 : f32
    %77 = vector.broadcast %cst_38 : f32 to vector<32x1xf32>
    %78 = arith.addf %76, %77 : vector<32x1xf32>
    %79 = math.rsqrt %78 : vector<32x1xf32>
    %80 = vector.broadcast %79 : vector<32x1xf32> to vector<32x128xf32>
    %81 = arith.mulf %71, %80 : vector<32x128xf32>
    %82 = vector.broadcast %64 : vector<1x128xf32> to vector<32x128xf32>
    %83 = arith.mulf %81, %82 : vector<32x128xf32>
    %84 = vector.broadcast %65 : vector<1x128xf32> to vector<32x128xf32>
    %85 = arith.addf %83, %84 : vector<32x128xf32>
    %cst_39 = arith.constant 0.000000e+00 : f32
    %86 = vector.broadcast %cst_39 : f32 to vector<32x128xf32>
    %87 = arith.maximumf %85, %86 : vector<32x128xf32>
    %88 = arith.truncf %87 : vector<32x128xf32> to vector<32x128xbf16>
    %c2_40 = arith.constant 2 : index
    %c0_41 = arith.constant 0 : index
    %c0_42 = arith.constant 0 : index
    %89 = vector.load %arg5[%c2_40, %c0_41, %c0_42] : memref<4x128x128xbf16, #tpu.memory_space<vmem>>, vector<1x128x128xbf16>
    %90 = vector.shape_cast %89 : vector<1x128x128xbf16> to vector<128x128xbf16>
    %cst_43 = arith.constant dense<0.000000e+00> : vector<32x128xf32>
    %91 = tpu.matmul %88, %90, %cst_43 {dimension_numbers = #tpu.dot_dimension_numbers<[1], [0], [0], [1], [0, 0, 1, 1], [], []>} : vector<32x128xbf16>, vector<128x128xbf16>, vector<32x128xf32> -> vector<32x128xf32>
    %c3 = arith.constant 3 : index
    %c0_44 = arith.constant 0 : index
    %92 = vector.load %arg3[%c3, %c0_44] : memref<5x128xf32, #tpu.memory_space<vmem>>, vector<1x128xf32>
    %c3_45 = arith.constant 3 : index
    %c0_46 = arith.constant 0 : index
    %93 = vector.load %arg4[%c3_45, %c0_46] : memref<5x128xf32, #tpu.memory_space<vmem>>, vector<1x128xf32>
    %cst_47 = arith.constant dense<0.000000e+00> : vector<32xf32>
    %94 = vector.multi_reduction <add>, %91, %cst_47 [1] : vector<32x128xf32> to vector<32xf32>
    %95 = vector.shape_cast %94 : vector<32xf32> to vector<32x1xf32>
    %cst_48 = arith.constant 1.280000e+02 : f32
    %96 = vector.broadcast %cst_48 : f32 to vector<32x1xf32>
    %97 = arith.divf %95, %96 : vector<32x1xf32>
    %98 = vector.broadcast %97 : vector<32x1xf32> to vector<32x128xf32>
    %99 = arith.subf %91, %98 : vector<32x128xf32>
    %100 = arith.mulf %99, %99 : vector<32x128xf32>
    %cst_49 = arith.constant dense<0.000000e+00> : vector<32xf32>
    %101 = vector.multi_reduction <add>, %100, %cst_49 [1] : vector<32x128xf32> to vector<32xf32>
    %102 = vector.shape_cast %101 : vector<32xf32> to vector<32x1xf32>
    %cst_50 = arith.constant 1.280000e+02 : f32
    %103 = vector.broadcast %cst_50 : f32 to vector<32x1xf32>
    %104 = arith.divf %102, %103 : vector<32x1xf32>
    %cst_51 = arith.constant 9.99999974E-6 : f32
    %105 = vector.broadcast %cst_51 : f32 to vector<32x1xf32>
    %106 = arith.addf %104, %105 : vector<32x1xf32>
    %107 = math.rsqrt %106 : vector<32x1xf32>
    %108 = vector.broadcast %107 : vector<32x1xf32> to vector<32x128xf32>
    %109 = arith.mulf %99, %108 : vector<32x128xf32>
    %110 = vector.broadcast %92 : vector<1x128xf32> to vector<32x128xf32>
    %111 = arith.mulf %109, %110 : vector<32x128xf32>
    %112 = vector.broadcast %93 : vector<1x128xf32> to vector<32x128xf32>
    %113 = arith.addf %111, %112 : vector<32x128xf32>
    %cst_52 = arith.constant 0.000000e+00 : f32
    %114 = vector.broadcast %cst_52 : f32 to vector<32x128xf32>
    %115 = arith.maximumf %113, %114 : vector<32x128xf32>
    %116 = arith.truncf %115 : vector<32x128xf32> to vector<32x128xbf16>
    %c3_53 = arith.constant 3 : index
    %c0_54 = arith.constant 0 : index
    %c0_55 = arith.constant 0 : index
    %117 = vector.load %arg5[%c3_53, %c0_54, %c0_55] : memref<4x128x128xbf16, #tpu.memory_space<vmem>>, vector<1x128x128xbf16>
    %118 = vector.shape_cast %117 : vector<1x128x128xbf16> to vector<128x128xbf16>
    %cst_56 = arith.constant dense<0.000000e+00> : vector<32x128xf32>
    %119 = tpu.matmul %116, %118, %cst_56 {dimension_numbers = #tpu.dot_dimension_numbers<[1], [0], [0], [1], [0, 0, 1, 1], [], []>} : vector<32x128xbf16>, vector<128x128xbf16>, vector<32x128xf32> -> vector<32x128xf32>
    %c4 = arith.constant 4 : index
    %c0_57 = arith.constant 0 : index
    %120 = vector.load %arg3[%c4, %c0_57] : memref<5x128xf32, #tpu.memory_space<vmem>>, vector<1x128xf32>
    %c4_58 = arith.constant 4 : index
    %c0_59 = arith.constant 0 : index
    %121 = vector.load %arg4[%c4_58, %c0_59] : memref<5x128xf32, #tpu.memory_space<vmem>>, vector<1x128xf32>
    %cst_60 = arith.constant dense<0.000000e+00> : vector<32xf32>
    %122 = vector.multi_reduction <add>, %119, %cst_60 [1] : vector<32x128xf32> to vector<32xf32>
    %123 = vector.shape_cast %122 : vector<32xf32> to vector<32x1xf32>
    %cst_61 = arith.constant 1.280000e+02 : f32
    %124 = vector.broadcast %cst_61 : f32 to vector<32x1xf32>
    %125 = arith.divf %123, %124 : vector<32x1xf32>
    %126 = vector.broadcast %125 : vector<32x1xf32> to vector<32x128xf32>
    %127 = arith.subf %119, %126 : vector<32x128xf32>
    %128 = arith.mulf %127, %127 : vector<32x128xf32>
    %cst_62 = arith.constant dense<0.000000e+00> : vector<32xf32>
    %129 = vector.multi_reduction <add>, %128, %cst_62 [1] : vector<32x128xf32> to vector<32xf32>
    %130 = vector.shape_cast %129 : vector<32xf32> to vector<32x1xf32>
    %cst_63 = arith.constant 1.280000e+02 : f32
    %131 = vector.broadcast %cst_63 : f32 to vector<32x1xf32>
    %132 = arith.divf %130, %131 : vector<32x1xf32>
    %cst_64 = arith.constant 9.99999974E-6 : f32
    %133 = vector.broadcast %cst_64 : f32 to vector<32x1xf32>
    %134 = arith.addf %132, %133 : vector<32x1xf32>
    %135 = math.rsqrt %134 : vector<32x1xf32>
    %136 = vector.broadcast %135 : vector<32x1xf32> to vector<32x128xf32>
    %137 = arith.mulf %127, %136 : vector<32x128xf32>
    %138 = vector.broadcast %120 : vector<1x128xf32> to vector<32x128xf32>
    %139 = arith.mulf %137, %138 : vector<32x128xf32>
    %140 = vector.broadcast %121 : vector<1x128xf32> to vector<32x128xf32>
    %141 = arith.addf %139, %140 : vector<32x128xf32>
    %cst_65 = arith.constant 0.000000e+00 : f32
    %142 = vector.broadcast %cst_65 : f32 to vector<32x128xf32>
    %143 = arith.maximumf %141, %142 : vector<32x128xf32>
    %144 = arith.truncf %143 : vector<32x128xf32> to vector<32x128xbf16>
    %c0_66 = arith.constant 0 : index
    %c0_67 = arith.constant 0 : index
    %145 = vector.load %arg6[%c0_66, %c0_67] : memref<128x128xbf16, #tpu.memory_space<vmem>>, vector<128x128xbf16>
    %cst_68 = arith.constant dense<0.000000e+00> : vector<32x128xf32>
    %146 = tpu.matmul %144, %145, %cst_68 {dimension_numbers = #tpu.dot_dimension_numbers<[1], [0], [0], [1], [0, 0, 1, 1], [], []>} : vector<32x128xbf16>, vector<128x128xbf16>, vector<32x128xf32> -> vector<32x128xf32>
    %c0_69 = arith.constant 0 : index
    %c0_70 = arith.constant 0 : index
    %147 = vector.load %arg7[%c0_69, %c0_70] : memref<1x128xf32, #tpu.memory_space<vmem>>, vector<1x128xf32>
    %148 = vector.broadcast %147 : vector<1x128xf32> to vector<32x128xf32>
    %149 = arith.addf %146, %148 : vector<32x128xf32>
    %c0_71 = arith.constant 0 : index
    %c0_72 = arith.constant 0 : index
    %c0_73 = arith.constant 0 : index
    %150 = vector.load %arg8[%c0_71, %c0_72, %c0_73] : memref<1x32x128xf32, #tpu.memory_space<vmem>>, vector<1x32x128xf32>
    %151 = vector.shape_cast %150 : vector<1x32x128xf32> to vector<32x128xf32>
    %152 = vector.shape_cast %149 : vector<32x128xf32> to vector<1x32x128xf32>
    tpu.vector_store %arg8[%c0_71, %c0_72, %c0_73], %152 {strides = array<i32>} : memref<1x32x128xf32, #tpu.memory_space<vmem>>, vector<1x32x128xf32>,
    return
  }
  func.func @transform_0(%arg0: i32) -> (i32, i32, i32) {
    %c0_i32 = arith.constant 0 : i32
    %c0_i32_0 = arith.constant 0 : i32
    %c0_i32_1 = arith.constant 0 : i32
    return %arg0, %c0_i32, %c0_i32_0 : i32, i32, i32
  }
  func.func @transform_1(%arg0: i32) -> (i32, i32) {
    %c0_i32 = arith.constant 0 : i32
    %c0_i32_0 = arith.constant 0 : i32
    %c0_i32_1 = arith.constant 0 : i32
    return %c0_i32, %c0_i32_0 : i32, i32
  }
  func.func @transform_2(%arg0: i32) -> (i32, i32) {
    %c0_i32 = arith.constant 0 : i32
    %c0_i32_0 = arith.constant 0 : i32
    %c0_i32_1 = arith.constant 0 : i32
    return %c0_i32, %c0_i32_0 : i32, i32
  }
  func.func @transform_3(%arg0: i32) -> (i32, i32) {
    %c0_i32 = arith.constant 0 : i32
    %c0_i32_0 = arith.constant 0 : i32
    %c0_i32_1 = arith.constant 0 : i32
    return %c0_i32, %c0_i32_0 : i32, i32
  }
  func.func @transform_4(%arg0: i32) -> (i32, i32, i32) {
    %c0_i32 = arith.constant 0 : i32
    %c0_i32_0 = arith.constant 0 : i32
    %c0_i32_1 = arith.constant 0 : i32
    %c0_i32_2 = arith.constant 0 : i32
    return %c0_i32, %c0_i32_0, %c0_i32_1 : i32, i32, i32
  }
  func.func @transform_5(%arg0: i32) -> (i32, i32) {
    %c0_i32 = arith.constant 0 : i32
    %c0_i32_0 = arith.constant 0 : i32
    %c0_i32_1 = arith.constant 0 : i32
    return %c0_i32, %c0_i32_0 : i32, i32
  }
  func.func @transform_6(%arg0: i32) -> (i32, i32) {
    %c0_i32 = arith.constant 0 : i32
    %c0_i32_0 = arith.constant 0 : i32
    %c0_i32_1 = arith.constant 0 : i32
    return %c0_i32, %c0_i32_0 : i32, i32
  }
  func.func @transform_7(%arg0: i32) -> (i32, i32, i32) {
    %c0_i32 = arith.constant 0 : i32
    %c0_i32_0 = arith.constant 0 : i32
    %c0_i32_1 = arith.constant 0 : i32
    return %arg0, %c0_i32, %c0_i32_0 : i32, i32, i32
  }
}

</mosaic_0001>

<llo_original>
// kernel: tpu_custom_call.1
$region0: #{tpu_custom_call.1}
  #allocation0 [shape = 'u32[]', space=smem, size = 0x4, offset = 0x4, fixed_abs, tag = 'smem constant byte address 0x4 - core index']
  #allocation1 [shape = 'u32[144,128]{1,0:T(1,128)}', space=vmem, size = 0x12000, scoped, tag = 'internal scratch']
  %s0 = inlined_call_operand.vmem [shape: f32[2,33,32], index: 0, kind: input, shape index: {}]
  %s1 = inlined_call_operand.vmem [shape: bf16[64,128], index: 1, kind: input, shape index: {}]
  %s2 = inlined_call_operand.vmem [shape: f32[5,128], index: 2, kind: input, shape index: {}]
  %s3 = inlined_call_operand.vmem [shape: f32[5,128], index: 3, kind: input, shape index: {}]
  %s4 = inlined_call_operand.hbm [shape: bf16[4,128,128], index: 4, kind: input, shape index: {}]
  %s5 = inlined_call_operand.vmem [shape: bf16[128,128], index: 5, kind: input, shape index: {}]
  %s6 = inlined_call_operand.vmem [shape: f32[1,128], index: 6, kind: input, shape index: {}]
  %s7 = inlined_call_operand.hbm [shape: f32[2,32,128], index: 7, kind: output, shape index: {}]
  %s8 = sld [smem:[#allocation0]]
  $region65: #{tpu_custom_call.1} parent=0
    _
  %s10 = ssub.s32 1, %s8
  %s11 = scalar_select 0, %s10, %s8
  $region1: #{tpu_custom_call.1} parent=0
    #allocation2 [shape = 'u8[131072]{0}', space=vmem, size = 0x20000, scoped, tag = 'input window, operand 4, single buffered']
    #allocation3 [shape = 's32[2]{0}', space=sflag, size = 0x8, scoped, tag = 'scoped memory for tpu_custom_call.1']
    #allocation4 [shape = 's32[2]{0}', space=sflag, size = 0x8, scoped, tag = 'scoped memory for tpu_custom_call.1']
    #allocation5 [shape = 'u8[32768]{0}', space=vmem, size = 0x8000, scoped, tag = 'output window, operand 0']
    %12 = vsyncpa [#allocation3], 0
    %13 = vsyncpa [#allocation4], 0
    %s14 = scalar_lea.sflag [#allocation4], 1
    %15 = vsyncpa %s14, 0
    loop: start=0, step=1, limit=4
    $region2: #{tpu_custom_call.1} parent=1 // loop_pre_header
      _
    $region3: #{tpu_custom_call.1} parent=1 // loop_header
      %s17 = sphi 0, %s21
      %p18 = scmp.ge.s32.totalorder %s17, 4
      %s27 = sphi 0, %s29
      %s30 = sphi 0, %s27
      %s31 = sphi 0, %s30
      %s47 = sphi 0, %s31
      %s51 = sphi 0, %s51
      %s53 = sphi 0, %s51
      %s54 = sphi 0, %s53
      %s68 = sphi 0, %s54
      %s72 = sphi 0, %s72
      %s74 = sphi 0, %s72
      %s75 = sphi 0, %s74
      %s89 = sphi 0, %s75
      %s93 = sphi 0, %s93
      %s95 = sphi 0, %s93
      %s96 = sphi 0, %s95
      %s110 = sphi 0, %s96
      %s114 = sphi 0, %s114
      %s116 = sphi 0, %s114
      %s117 = sphi 0, %s116
      %s131 = sphi 0, %s117
      %s135 = sphi 0, %s135
      %s137 = sphi 0, %s135
      %s138 = sphi 0, %s137
      %s152 = sphi 0, %s138
      %s156 = sphi 0, %s156
      %s158 = sphi 0, %s156
      %s159 = sphi 0, %s158
      %s173 = sphi 0, %s159
      %s179 = sphi 0, %s181
      %s182 = sphi 0, %s179
      %s183 = sphi 0, %s182
      %s199 = sphi 0, %s183
    $region4: #{tpu_custom_call.1} parent=1 // loop_header_branch
      %20 = sbr.rel (%p18) target = $region8
    $region5: #{tpu_custom_call.1} parent=1 // loop_body
      %s22 = ssub.s32 %s17, 1
      %s23 = ssub.s32 %s17, 2
      %s24 = sadd.s32 %s17, 1
      %s25 = ssub.s32 %s17, %s24
      %p26 = scmp.eq.s32.totalorder %s25, 0
      %s28 = sadd.s32 %s27, 1
      %s29 = scalar_select %p26, %s27, %s28
      %p32 = pneg %p26
      %p33 = scmp.eq.s32.totalorder %s17, 1
      %p34 = por %p32, %p33
      %p35 = scmp.ne.s32.totalorder %s27, %s30
      %p36 = scmp.eq.s32.totalorder %s17, 0
      %p37 = por %p35, %p36
      %p38 = scmp.ne.s32.totalorder %s27, %s30
      %p39 = scmp.eq.s32.totalorder %s22, 1
      %p40 = por %p38, %p39
      %p41 = scmp.ne.s32.totalorder %s30, %s31
      %p42 = scmp.eq.s32.totalorder %s22, 0
      %p43 = por %p41, %p42
      %p44 = scmp.ne.s32.totalorder %s30, %s31
      %p45 = scmp.eq.s32.totalorder %s23, 1
      %p46 = por %p44, %p45
      %p48 = scmp.ne.s32.totalorder %s31, %s47
      %p49 = scmp.eq.s32.totalorder %s23, 0
      %p50 = por %p48, %p49
      %s52 = sadd.s32 %s51, 1
      %p55 = scmp.eq.s32.totalorder %s17, 1
      %p56 = scmp.ne.s32.totalorder %s51, %s53
      %p57 = scmp.eq.s32.totalorder %s17, 0
      %p58 = por %p56, %p57
      %p59 = scmp.ne.s32.totalorder %s51, %s53
      %p60 = scmp.eq.s32.totalorder %s22, 1
      %p61 = por %p59, %p60
      %p62 = scmp.ne.s32.totalorder %s53, %s54
      %p63 = scmp.eq.s32.totalorder %s22, 0
      %p64 = por %p62, %p63
      %p65 = scmp.ne.s32.totalorder %s53, %s54
      %p66 = scmp.eq.s32.totalorder %s23, 1
      %p67 = por %p65, %p66
      %p69 = scmp.ne.s32.totalorder %s54, %s68
      %p70 = scmp.eq.s32.totalorder %s23, 0
      %p71 = por %p69, %p70
      %s73 = sadd.s32 %s72, 1
      %p76 = scmp.eq.s32.totalorder %s17, 1
      %p77 = scmp.ne.s32.totalorder %s72, %s74
      %p78 = scmp.eq.s32.totalorder %s17, 0
      %p79 = por %p77, %p78
      %p80 = scmp.ne.s32.totalorder %s72, %s74
      %p81 = scmp.eq.s32.totalorder %s22, 1
      %p82 = por %p80, %p81
      %p83 = scmp.ne.s32.totalorder %s74, %s75
      %p84 = scmp.eq.s32.totalorder %s22, 0
      %p85 = por %p83, %p84
      %p86 = scmp.ne.s32.totalorder %s74, %s75
      %p87 = scmp.eq.s32.totalorder %s23, 1
      %p88 = por %p86, %p87
      %p90 = scmp.ne.s32.totalorder %s75, %s89
      %p91 = scmp.eq.s32.totalorder %s23, 0
      %p92 = por %p90, %p91
      %s94 = sadd.s32 %s93, 1
      %p97 = scmp.eq.s32.totalorder %s17, 1
      %p98 = scmp.ne.s32.totalorder %s93, %s95
      %p99 = scmp.eq.s32.totalorder %s17, 0
      %p100 = por %p98, %p99
      %p101 = scmp.ne.s32.totalorder %s93, %s95
      %p102 = scmp.eq.s32.totalorder %s22, 1
      %p103 = por %p101, %p102
      %p104 = scmp.ne.s32.totalorder %s95, %s96
      %p105 = scmp.eq.s32.totalorder %s22, 0
      %p106 = por %p104, %p105
      %p107 = scmp.ne.s32.totalorder %s95, %s96
      %p108 = scmp.eq.s32.totalorder %s23, 1
      %p109 = por %p107, %p108
      %p111 = scmp.ne.s32.totalorder %s96, %s110
      %p112 = scmp.eq.s32.totalorder %s23, 0
      %p113 = por %p111, %p112
      %s115 = sadd.s32 %s114, 1
      %p118 = scmp.eq.s32.totalorder %s17, 1
      %p119 = scmp.ne.s32.totalorder %s114, %s116
      %p120 = scmp.eq.s32.totalorder %s17, 0
      %p121 = por %p119, %p120
      %p122 = scmp.ne.s32.totalorder %s114, %s116
      %p123 = scmp.eq.s32.totalorder %s22, 1
      %p124 = por %p122, %p123
      %p125 = scmp.ne.s32.totalorder %s116, %s117
      %p126 = scmp.eq.s32.totalorder %s22, 0
      %p127 = por %p125, %p126
      %p128 = scmp.ne.s32.totalorder %s116, %s117
      %p129 = scmp.eq.s32.totalorder %s23, 1
      %p130 = por %p128, %p129
      %p132 = scmp.ne.s32.totalorder %s117, %s131
      %p133 = scmp.eq.s32.totalorder %s23, 0
      %p134 = por %p132, %p133
      %s136 = sadd.s32 %s135, 1
      %p139 = scmp.eq.s32.totalorder %s17, 1
      %p140 = scmp.ne.s32.totalorder %s135, %s137
      %p141 = scmp.eq.s32.totalorder %s17, 0
      %p142 = por %p140, %p141
      %p143 = scmp.ne.s32.totalorder %s135, %s137
      %p144 = scmp.eq.s32.totalorder %s22, 1
      %p145 = por %p143, %p144
      %p146 = scmp.ne.s32.totalorder %s137, %s138
      %p147 = scmp.eq.s32.totalorder %s22, 0
      %p148 = por %p146, %p147
      %p149 = scmp.ne.s32.totalorder %s137, %s138
      %p150 = scmp.eq.s32.totalorder %s23, 1
      %p151 = por %p149, %p150
      %p153 = scmp.ne.s32.totalorder %s138, %s152
      %p154 = scmp.eq.s32.totalorder %s23, 0
      %p155 = por %p153, %p154
      %s157 = sadd.s32 %s156, 1
      %p160 = scmp.eq.s32.totalorder %s17, 1
      %p161 = scmp.ne.s32.totalorder %s156, %s158
      %p162 = scmp.eq.s32.totalorder %s17, 0
      %p163 = por %p161, %p162
      %p164 = scmp.ne.s32.totalorder %s156, %s158
      %p165 = scmp.eq.s32.totalorder %s22, 1
      %p166 = por %p164, %p165
      %p167 = scmp.ne.s32.totalorder %s158, %s159
      %p168 = scmp.eq.s32.totalorder %s22, 0
      %p169 = por %p167, %p168
      %p170 = scmp.ne.s32.totalorder %s158, %s159
      %p171 = scmp.eq.s32.totalorder %s23, 1
      %p172 = por %p170, %p171
      %p174 = scmp.ne.s32.totalorder %s159, %s173
      %p175 = scmp.eq.s32.totalorder %s23, 0
      %p176 = por %p174, %p175
      %s177 = ssub.s32 %s17, %s24
      %p178 = scmp.eq.s32.totalorder %s177, 0
      %s180 = sadd.s32 %s179, 1
      %s181 = scalar_select %p178, %s179, %s180
      %p184 = pneg %p178
      %p185 = scmp.eq.s32.totalorder %s17, 1
      %p186 = por %p184, %p185
      %p187 = scmp.ne.s32.totalorder %s179, %s182
      %p188 = scmp.eq.s32.totalorder %s17, 0
      %p189 = por %p187, %p188
      %p190 = scmp.ne.s32.totalorder %s179, %s182
      %p191 = scmp.eq.s32.totalorder %s22, 1
      %p192 = por %p190, %p191
      %p193 = scmp.ne.s32.totalorder %s182, %s183
      %p194 = scmp.eq.s32.totalorder %s22, 0
      %p195 = por %p193, %p194
      %p196 = scmp.ne.s32.totalorder %s182, %s183
      %p197 = scmp.eq.s32.totalorder %s23, 1
      %p198 = por %p196, %p197
      %p200 = scmp.ne.s32.totalorder %s183, %s199
      %p201 = scmp.eq.s32.totalorder %s23, 0
      %p202 = por %p200, %p201
      %p203 = scmp.le.s32.totalorder 1, %s17
      %p204 = scmp.lt.s32.totalorder %s17, 3
      %p205 = pnand %p203, %p204
      %p206 = pneg %p205
      // Predicated region
      $region9: #{tpu_custom_call.1} parent=5 // pred_check
        _
      $region10: #{tpu_custom_call.1} parent=5 // pred_check_branch
        %208 = sbr.rel (%p205) target = $region12
      $region11: #{tpu_custom_call.1} parent=5 // pred_region
        %s209 = ssub.s32 %s17, 1
        // Predicated region
        $region13: #{tpu_custom_call.1} parent=11 // pred_check
          %p210 = pneg %p64
        $region14: #{tpu_custom_call.1} parent=11 // pred_check_branch
          %212 = sbr.rel (%p210) target = $region16
        $region15: #{tpu_custom_call.1} parent=11 // pred_region
          _
        $region16: #{tpu_custom_call.1} parent=11 // pred_fallthru
          _
        // Predicated region
        $region17: #{tpu_custom_call.1} parent=11 // pred_check
          %p213 = pneg %p85
        $region18: #{tpu_custom_call.1} parent=11 // pred_check_branch
          %215 = sbr.rel (%p213) target = $region20
        $region19: #{tpu_custom_call.1} parent=11 // pred_region
          _
        $region20: #{tpu_custom_call.1} parent=11 // pred_fallthru
          _
        // Predicated region
        $region21: #{tpu_custom_call.1} parent=11 // pred_check
          %p216 = pneg %p106
        $region22: #{tpu_custom_call.1} parent=11 // pred_check_branch
          %218 = sbr.rel (%p216) target = $region24
        $region23: #{tpu_custom_call.1} parent=11 // pred_region
          _
        $region24: #{tpu_custom_call.1} parent=11 // pred_fallthru
          _
        // Predicated region
        $region25: #{tpu_custom_call.1} parent=11 // pred_check
          %p219 = pneg %p127
        $region26: #{tpu_custom_call.1} parent=11 // pred_check_branch
          %221 = sbr.rel (%p219) target = $region28
        $region27: #{tpu_custom_call.1} parent=11 // pred_region
          %s223 = ssub.s32 4096, 4096
          %224 = vsyncadd [#allocation3], %s223
          %s225 = sshll.u32 [#allocation2], 4
          %s226 = int_to_ptr.vmem [resolvable:$true] %s225
          %231 = dma.hbm_to_vmem [thread:$0]  %s4, 4096, %s226, [#allocation3], 64, 64, 4
        $region28: #{tpu_custom_call.1} parent=11 // pred_fallthru
          _
        // Predicated region
        $region29: #{tpu_custom_call.1} parent=11 // pred_check
          %p232 = pneg %p148
        $region30: #{tpu_custom_call.1} parent=11 // pred_check_branch
          %234 = sbr.rel (%p232) target = $region32
        $region31: #{tpu_custom_call.1} parent=11 // pred_region
          _
        $region32: #{tpu_custom_call.1} parent=11 // pred_fallthru
          _
        // Predicated region
        $region33: #{tpu_custom_call.1} parent=11 // pred_check
          %p235 = pneg %p169
        $region34: #{tpu_custom_call.1} parent=11 // pred_check_branch
          %237 = sbr.rel (%p235) target = $region36
        $region35: #{tpu_custom_call.1} parent=11 // pred_region
          _
        $region36: #{tpu_custom_call.1} parent=11 // pred_fallthru
          _
      $region12: #{tpu_custom_call.1} parent=5 // pred_fallthru
        _
      %p238 = scmp.lt.s32.totalorder %s17, 2
      // Predicated region
      $region37: #{tpu_custom_call.1} parent=5 // pred_check
        %p239 = pneg %p238
      $region38: #{tpu_custom_call.1} parent=5 // pred_check_branch
        %241 = sbr.rel (%p239) target = $region40
      $region39: #{tpu_custom_call.1} parent=5 // pred_region
        // Predicated region
        $region41: #{tpu_custom_call.1} parent=39 // pred_check
          %p242 = pneg %p37
        $region42: #{tpu_custom_call.1} parent=39 // pred_check_branch
          %244 = sbr.rel (%p242) target = $region44
        $region43: #{tpu_custom_call.1} parent=39 // pred_region
          %p245 = scmp.lt.s32.totalorder %s17, 1
          %s246 = scalar_select %p245, %s17, 1
          %s247 = smul.addr %s246, 5
          %s248 = smul.addr %s247, 8
          %s249 = scalar_lea.vmem %s0, %s248
        $region44: #{tpu_custom_call.1} parent=39 // pred_fallthru
          _
      $region40: #{tpu_custom_call.1} parent=5 // pred_fallthru
        _
      %p250 = scmp.le.s32.totalorder 1, %s17
      %p251 = scmp.lt.s32.totalorder %s17, 3
      %p252 = pnand %p250, %p251
      %p253 = pneg %p252
      // Predicated region
      $region45: #{tpu_custom_call.1} parent=5 // pred_check
        _
      $region46: #{tpu_custom_call.1} parent=5 // pred_check_branch
        %255 = sbr.rel (%p252) target = $region48
      $region47: #{tpu_custom_call.1} parent=5 // pred_region
        %s256 = ssub.s32 %s17, 1
        // Predicated region
        $region49: #{tpu_custom_call.1} parent=47 // pred_check
          %p257 = pneg %p127
        $region50: #{tpu_custom_call.1} parent=47 // pred_check_branch
          %259 = sbr.rel (%p257) target = $region52
        $region51: #{tpu_custom_call.1} parent=47 // pred_region
          %260 = dma.done [#allocation3], 4096
        $region52: #{tpu_custom_call.1} parent=47 // pred_fallthru
          _
        %p261 = scmp.lt.s32.totalorder %s22, 1
        %s262 = scalar_select %p261, %s22, 1
        %s263 = smul.addr %s262, 5
        %s264 = smul.addr %s263, 8
        %s265 = scalar_lea.vmem %s0, %s264
        %p266 = pneg %p43
        %p267 = pneg %p40
        %p268 = pneg %p64
        %p269 = pneg %p61
        %p270 = pneg %p85
        %p271 = pneg %p82
        %p272 = pneg %p106
        %p273 = pneg %p103
        %p274 = pneg %p127
        %p275 = pneg %p124
        %p276 = pneg %p148
        %p277 = pneg %p145
        %p278 = pneg %p169
        %p279 = pneg %p166
        %p280 = pneg %p195
        %p281 = pneg %p192
        %s282 = sand.u32 %s182, 1
        %s283 = scalar_lea.sflag [#allocation4], %s282
        %s284 = sand.u32 %s182, 1
        %s285 = smul.addr %s284, 32
        %s286 = scalar_lea.vmem [#allocation5], %s285
        %p287 = scmp.lt.s32.totalorder %s22, 1
        %s288 = scalar_select %p287, %s22, 1
        %s289 = smul.addr %s288, 5
        %s290 = smul.addr %s289, 8
        %s291 = scalar_lea.vmem %s0, %s290
        %v293 = vld [vmem:[%s291] sm:$0xff]
        %v294 = vld [vmem:[%s291 + $0x8] sm:$0xff]
        %v295 = vld [vmem:[%s291 + $0x10] sm:$0xff]
        %v296 = vld [vmem:[%s291 + $0x18] sm:$0xff]
        %v297 = vld [vmem:[%s291 + $0x20] sm:$0x1]
        %vm303 = vcmask 1046528
        %v304 = vrot.slane %v293, 1
        %v305 = vrot.slane %v294, 1
        %v306 = vsel %vm303, %v304, %v305
        %v307 = vrot.slane %v295, 1
        %v308 = vsel %vm303, %v305, %v307
        %v309 = vrot.slane %v296, 1
        %v310 = vsel %vm303, %v307, %v309
        %v311 = vrot.slane %v297, 1
        %v312 = vsel %vm303, %v309, %v311
        %313 = vrot.lane.b32.xlu0 %v306, 32
        %v314 = vpop.permute.xlu0 %313
        %315 = vrot.lane.b32.xlu0 %v308, 32
        %v316 = vpop.permute.xlu0 %315
        %317 = vrot.lane.b32.xlu0 %v310, 32
        %v318 = vpop.permute.xlu0 %317
        %319 = vrot.lane.b32.xlu0 %v312, 32
        %v320 = vpop.permute.xlu0 %319
        %vm325 = vcmask 261120
        %v326 = vsel %vm325, %v293, %v314
        %v327 = vsel %vm325, %v294, %v316
        %v328 = vsel %vm325, %v295, %v318
        %v329 = vsel %vm325, %v296, %v320
        %v330 = vpack.c.bf16 %v327, %v326
        %v331 = vpack.c.bf16 %v329, %v328
        %v332 = vld [vmem:[%s1] sm:$0xf]
        %v333 = vld [vmem:[%s1 + $0x4] sm:$0xf]
        %v334 = vld [vmem:[%s1 + $0x8] sm:$0xf]
        %v335 = vld [vmem:[%s1 + $0xc] sm:$0xf]
        %v336 = vld [vmem:[%s1 + $0x10] sm:$0xf]
        %v337 = vld [vmem:[%s1 + $0x14] sm:$0xf]
        %v338 = vld [vmem:[%s1 + $0x18] sm:$0xf]
        %v339 = vld [vmem:[%s1 + $0x1c] sm:$0xf]
        %v348 = vunpack.c.l.b16 %v332
        %v349 = vunpack.c.l.b16 %v333
        %v350 = vunpack.c.l.b16 %v334
        %v351 = vunpack.c.l.b16 %v335
        %v352 = vunpack.c.l.b16 %v336
        %v353 = vunpack.c.l.b16 %v337
        %v354 = vunpack.c.l.b16 %v338
        %v355 = vunpack.c.l.b16 %v339
        %v356 = vpack.c.b16 %v349, %v348
        %v357 = vpack.c.b16 %v351, %v350
        %v358 = vpack.c.b16 %v353, %v352
        %v359 = vpack.c.b16 %v355, %v354
        %vm364 = vcmask 523264
        %v366 = vsel %vm364, %v330, 0
        %v369 = vsel %vm364, %v331, 0
        %371 = vmatprep.subr.bf16.mxu0 0
        %372 = vmatpush1.bf16.msra.mxu0 %v356
        %373 = vmatprep.subr.bf16.mxu0 0
        %374 = vmatpush1.bf16.msra.mxu0 %v357
        %375 = vmatprep.subr.bf16.mxu0 0
        %376 = vmatpush1.bf16.msra.mxu0 %v358
        %377 = vmatprep.subr.bf16.mxu0 0
        %378 = vmatpush1.bf16.msra.mxu0 %v359
        %379 = vmatprep.subr.bf16.mxu0 0
        %380 = vmatpush1.bf16.msra.mxu0 0
        %381 = vmatprep.subr.bf16.mxu0 0
        %382 = vmatpush1.bf16.msra.mxu0 0
        %383 = vmatprep.subr.bf16.mxu0 0
        %384 = vmatpush1.bf16.msra.mxu0 0
        %385 = vmatprep.subr.bf16.mxu0 0
        %386 = vmatpush1.bf16.msra.mxu0 0
        %387 = vmatprep.subr.bf16.mxu0 0
        %388 = vmatpush1.bf16.msra.mxu0 0
        %389 = vmatprep.subr.bf16.mxu0 0
        %390 = vmatpush1.bf16.msra.mxu0 0
        %391 = vmatprep.subr.bf16.mxu0 0
        %392 = vmatpush1.bf16.msra.mxu0 0
        %393 = vmatprep.subr.bf16.mxu0 0
        %394 = vmatpush1.bf16.msra.mxu0 0
        %395 = vmatprep.subr.bf16.mxu0 0
        %396 = vmatpush1.bf16.msra.mxu0 0
        %397 = vmatprep.subr.bf16.mxu0 0
        %398 = vmatpush1.bf16.msra.mxu0 0
        %399 = vmatprep.subr.bf16.mxu0 0
        %400 = vmatpush1.bf16.msra.mxu0 0
        %401 = vmatprep.subr.bf16.mxu0 0
        %402 = vmatpush1.bf16.msra.mxu0 0
        %403 = vmatprep.mubr.bf16.mxu0 0
        %404 = vmatmul.mubr.bf16.gmra.mrb[0].mxu0 %v366
        %v405 = vpop.f32.mrb[0].mxu0
        %v406 = vadd.f32 0.0, %v405
        %v407 = vpop.f32.mrb[0].mxu0
        %v408 = vpop.f32.mrb[0].mxu0
        %v409 = vadd.f32 0.0, %v408
        %v410 = vpop.f32.mrb[0].mxu0
        %411 = vmatprep.mubr.bf16.mxu0 0
        %412 = vmatmul.mubr.bf16.gmra.mrb[0].mxu0 %v369
        %v413 = vpop.f32.mrb[0].mxu0
        %v414 = vadd.f32 0.0, %v413
        %v415 = vpop.f32.mrb[0].mxu0
        %v416 = vpop.f32.mrb[0].mxu0
        %v417 = vadd.f32 0.0, %v416
        %v418 = vpop.f32.mrb[0].mxu0
        %419 = vdwg.mxu0
        %v420 = vld [vmem:[%s2] sm:$0x1]
        %v421 = vld [vmem:[%s3] sm:$0x1]
        %422 = vadd.xlane.f32.xlu0 %v406
        %v423 = vpop.xlane.xlu0 %422
        %424 = vadd.xlane.f32.xlu0 %v409
        %v425 = vpop.xlane.xlu0 %424
        %426 = vadd.xlane.f32.xlu0 %v414
        %v427 = vpop.xlane.xlu0 %426
        %428 = vadd.xlane.f32.xlu0 %v417
        %v429 = vpop.xlane.xlu0 %428
        %v430 = vrcp.pop 128.0
        %v431 = vmul.f32 %v423, %v430
        %v432 = vmul.f32 %v425, %v430
        %v433 = vmul.f32 %v427, %v430
        %v434 = vmul.f32 %v429, %v430
        %v435 = vsub.f32 %v406, %v431
        %v436 = vsub.f32 %v409, %v432
        %v437 = vsub.f32 %v414, %v433
        %v438 = vsub.f32 %v417, %v434
        %v439 = vmul.f32 %v435, %v435
        %v440 = vmul.f32 %v436, %v436
        %v441 = vmul.f32 %v437, %v437
        %v442 = vmul.f32 %v438, %v438
        %443 = vadd.xlane.f32.xlu0 %v439
        %v444 = vpop.xlane.xlu0 %443
        %445 = vadd.xlane.f32.xlu0 %v440
        %v446 = vpop.xlane.xlu0 %445
        %447 = vadd.xlane.f32.xlu0 %v441
        %v448 = vpop.xlane.xlu0 %447
        %449 = vadd.xlane.f32.xlu0 %v442
        %v450 = vpop.xlane.xlu0 %449
        %v451 = vmul.f32 %v444, %v430
        %v452 = vmul.f32 %v446, %v430
        %v453 = vmul.f32 %v448, %v430
        %v454 = vmul.f32 %v450, %v430
        %v455 = vadd.f32 %v451, 1e-05
        %v456 = vadd.f32 %v452, 1e-05
        %v457 = vadd.f32 %v453, 1e-05
        %v458 = vadd.f32 %v454, 1e-05
        %v459 = vrsqrt.pop %v455
        %v460 = vrsqrt.pop %v456
        %v461 = vrsqrt.pop %v457
        %v462 = vrsqrt.pop %v458
        %v463 = vmul.f32 %v435, %v459
        %v464 = vmul.f32 %v436, %v460
        %v465 = vmul.f32 %v437, %v461
        %v466 = vmul.f32 %v438, %v462
        %v467 = vlaneseq
        %v468 = vshrl.u32 %v467, 7
        %v469 = vsub.s32 0, %v468
        %v470 = vrot.slane %v420, %v469
        %v471 = vmul.f32 %v463, %v470
        %v472 = vmul.f32 %v464, %v470
        %v473 = vmul.f32 %v465, %v470
        %v474 = vmul.f32 %v466, %v470
        %v475 = vlaneseq
        %v476 = vshrl.u32 %v475, 7
        %v477 = vsub.s32 0, %v476
        %v478 = vrot.slane %v421, %v477
        %v479 = vadd.f32 %v471, %v478
        %v480 = vadd.f32 %v472, %v478
        %v481 = vadd.f32 %v473, %v478
        %v482 = vadd.f32 %v474, %v478
        %v483 = vmax.f32 %v479, 0.0
        %v484 = vmax.f32 %v480, 0.0
        %v485 = vmax.f32 %v481, 0.0
        %v486 = vmax.f32 %v482, 0.0
        %v487 = vpack.c.bf16 %v484, %v483
        %v488 = vpack.c.bf16 %v486, %v485
        %v489 = vld [vmem:[#allocation2] sm:$0xf]
        %v490 = vld [vmem:[#allocation2 + $0x4] sm:$0xf]
        %v491 = vld [vmem:[#allocation2 + $0x8] sm:$0xf]
        %v492 = vld [vmem:[#allocation2 + $0xc] sm:$0xf]
        %v493 = vld [vmem:[#allocation2 + $0x10] sm:$0xf]
        %v494 = vld [vmem:[#allocation2 + $0x14] sm:$0xf]
        %v495 = vld [vmem:[#allocation2 + $0x18] sm:$0xf]
        %v496 = vld [vmem:[#allocation2 + $0x1c] sm:$0xf]
        %v497 = vld [vmem:[#allocation2 + $0x20] sm:$0xf]
        %v498 = vld [vmem:[#allocation2 + $0x24] sm:$0xf]
        %v499 = vld [vmem:[#allocation2 + $0x28] sm:$0xf]
        %v500 = vld [vmem:[#allocation2 + $0x2c] sm:$0xf]
        %v501 = vld [vmem:[#allocation2 + $0x30] sm:$0xf]
        %v502 = vld [vmem:[#allocation2 + $0x34] sm:$0xf]
        %v503 = vld [vmem:[#allocation2 + $0x38] sm:$0xf]
        %v504 = vld [vmem:[#allocation2 + $0x3c] sm:$0xf]
        %v521 = vunpack.c.l.b16 %v489
        %v522 = vunpack.c.l.b16 %v490
        %v523 = vunpack.c.l.b16 %v491
        %v524 = vunpack.c.l.b16 %v492
        %v525 = vunpack.c.l.b16 %v493
        %v526 = vunpack.c.l.b16 %v494
        %v527 = vunpack.c.l.b16 %v495
        %v528 = vunpack.c.l.b16 %v496
        %v529 = vunpack.c.l.b16 %v497
        %v530 = vunpack.c.l.b16 %v498
        %v531 = vunpack.c.l.b16 %v499
        %v532 = vunpack.c.l.b16 %v500
        %v533 = vunpack.c.l.b16 %v501
        %v534 = vunpack.c.l.b16 %v502
        %v535 = vunpack.c.l.b16 %v503
        %v536 = vunpack.c.l.b16 %v504
        %v537 = vpack.c.b16 %v522, %v521
        %v538 = vpack.c.b16 %v524, %v523
        %v539 = vpack.c.b16 %v526, %v525
        %v540 = vpack.c.b16 %v528, %v527
        %v541 = vpack.c.b16 %v530, %v529
        %v542 = vpack.c.b16 %v532, %v531
        %v543 = vpack.c.b16 %v534, %v533
        %v544 = vpack.c.b16 %v536, %v535
        %553 = vmatprep.subr.bf16.mxu0 0
        %554 = vmatpush1.bf16.msra.mxu0 %v537
        %555 = vmatprep.subr.bf16.mxu0 0
        %556 = vmatpush1.bf16.msra.mxu0 %v538
        %557 = vmatprep.subr.bf16.mxu0 0
        %558 = vmatpush1.bf16.msra.mxu0 %v539
        %559 = vmatprep.subr.bf16.mxu0 0
        %560 = vmatpush1.bf16.msra.mxu0 %v540
        %561 = vmatprep.subr.bf16.mxu0 0
        %562 = vmatpush1.bf16.msra.mxu0 %v541
        %563 = vmatprep.subr.bf16.mxu0 0
        %564 = vmatpush1.bf16.msra.mxu0 %v542
        %565 = vmatprep.subr.bf16.mxu0 0
        %566 = vmatpush1.bf16.msra.mxu0 %v543
        %567 = vmatprep.subr.bf16.mxu0 0
        %568 = vmatpush1.bf16.msra.mxu0 %v544
        %569 = vmatprep.subr.bf16.mxu0 0
        %570 = vmatpush1.bf16.msra.mxu0 0
        %571 = vmatprep.subr.bf16.mxu0 0
        %572 = vmatpush1.bf16.msra.mxu0 0
        %573 = vmatprep.subr.bf16.mxu0 0
        %574 = vmatpush1.bf16.msra.mxu0 0
        %575 = vmatprep.subr.bf16.mxu0 0
        %576 = vmatpush1.bf16.msra.mxu0 0
        %577 = vmatprep.subr.bf16.mxu0 0
        %578 = vmatpush1.bf16.msra.mxu0 0
        %579 = vmatprep.subr.bf16.mxu0 0
        %580 = vmatpush1.bf16.msra.mxu0 0
        %581 = vmatprep.subr.bf16.mxu0 0
        %582 = vmatpush1.bf16.msra.mxu0 0
        %583 = vmatprep.subr.bf16.mxu0 0
        %584 = vmatpush1.bf16.msra.mxu0 0
        %585 = vmatprep.mubr.bf16.mxu0 0
        %586 = vmatmul.mubr.bf16.gmra.mrb[0].mxu0 %v487
        %v587 = vpop.f32.mrb[0].mxu0
        %v588 = vadd.f32 0.0, %v587
        %v589 = vpop.f32.mrb[0].mxu0
        %v590 = vpop.f32.mrb[0].mxu0
        %v591 = vadd.f32 0.0, %v590
        %v592 = vpop.f32.mrb[0].mxu0
        %593 = vmatprep.mubr.bf16.mxu0 0
        %594 = vmatmul.mubr.bf16.gmra.mrb[0].mxu0 %v488
        %v595 = vpop.f32.mrb[0].mxu0
        %v596 = vadd.f32 0.0, %v595
        %v597 = vpop.f32.mrb[0].mxu0
        %v598 = vpop.f32.mrb[0].mxu0
        %v599 = vadd.f32 0.0, %v598
        %v600 = vpop.f32.mrb[0].mxu0
        %601 = vdwg.mxu0
        %v602 = vld [vmem:[%s2 + $0x1] sm:$0x1]
        %v603 = vld [vmem:[%s3 + $0x1] sm:$0x1]
        %604 = vadd.xlane.f32.xlu0 %v588
        %v605 = vpop.xlane.xlu0 %604
        %606 = vadd.xlane.f32.xlu0 %v591
        %v607 = vpop.xlane.xlu0 %606
        %608 = vadd.xlane.f32.xlu0 %v596
        %v609 = vpop.xlane.xlu0 %608
        %610 = vadd.xlane.f32.xlu0 %v599
        %v611 = vpop.xlane.xlu0 %610
        %v612 = vmul.f32 %v605, %v430
        %v613 = vmul.f32 %v607, %v430
        %v614 = vmul.f32 %v609, %v430
        %v615 = vmul.f32 %v611, %v430
        %v616 = vsub.f32 %v588, %v612
        %v617 = vsub.f32 %v591, %v613
        %v618 = vsub.f32 %v596, %v614
        %v619 = vsub.f32 %v599, %v615
        %v620 = vmul.f32 %v616, %v616
        %v621 = vmul.f32 %v617, %v617
        %v622 = vmul.f32 %v618, %v618
        %v623 = vmul.f32 %v619, %v619
        %624 = vadd.xlane.f32.xlu0 %v620
        %v625 = vpop.xlane.xlu0 %624
        %626 = vadd.xlane.f32.xlu0 %v621
        %v627 = vpop.xlane.xlu0 %626
        %628 = vadd.xlane.f32.xlu0 %v622
        %v629 = vpop.xlane.xlu0 %628
        %630 = vadd.xlane.f32.xlu0 %v623
        %v631 = vpop.xlane.xlu0 %630
        %v632 = vmul.f32 %v625, %v430
        %v633 = vmul.f32 %v627, %v430
        %v634 = vmul.f32 %v629, %v430
        %v635 = vmul.f32 %v631, %v430
        %v636 = vadd.f32 %v632, 1e-05
        %v637 = vadd.f32 %v633, 1e-05
        %v638 = vadd.f32 %v634, 1e-05
        %v639 = vadd.f32 %v635, 1e-05
        %v640 = vrsqrt.pop %v636
        %v641 = vrsqrt.pop %v637
        %v642 = vrsqrt.pop %v638
        %v643 = vrsqrt.pop %v639
        %v644 = vmul.f32 %v616, %v640
        %v645 = vmul.f32 %v617, %v641
        %v646 = vmul.f32 %v618, %v642
        %v647 = vmul.f32 %v619, %v643
        %v648 = vlaneseq
        %v649 = vshrl.u32 %v648, 7
        %v650 = vsub.s32 0, %v649
        %v651 = vrot.slane %v602, %v650
        %v652 = vmul.f32 %v644, %v651
        %v653 = vmul.f32 %v645, %v651
        %v654 = vmul.f32 %v646, %v651
        %v655 = vmul.f32 %v647, %v651
        %v656 = vlaneseq
        %v657 = vshrl.u32 %v656, 7
        %v658 = vsub.s32 0, %v657
        %v659 = vrot.slane %v603, %v658
        %v660 = vadd.f32 %v652, %v659
        %v661 = vadd.f32 %v653, %v659
        %v662 = vadd.f32 %v654, %v659
        %v663 = vadd.f32 %v655, %v659
        %v664 = vmax.f32 %v660, 0.0
        %v665 = vmax.f32 %v661, 0.0
        %v666 = vmax.f32 %v662, 0.0
        %v667 = vmax.f32 %v663, 0.0
        %v668 = vpack.c.bf16 %v665, %v664
        %v669 = vpack.c.bf16 %v667, %v666
        %s670 = scalar_lea.vmem [#allocation2], 64
        %v671 = vld [vmem:[%s670] sm:$0xf]
        %v672 = vld [vmem:[%s670 + $0x4] sm:$0xf]
        %v673 = vld [vmem:[%s670 + $0x8] sm:$0xf]
        %v674 = vld [vmem:[%s670 + $0xc] sm:$0xf]
        %v675 = vld [vmem:[%s670 + $0x10] sm:$0xf]
        %v676 = vld [vmem:[%s670 + $0x14] sm:$0xf]
        %v677 = vld [vmem:[%s670 + $0x18] sm:$0xf]
        %v678 = vld [vmem:[%s670 + $0x1c] sm:$0xf]
        %v679 = vld [vmem:[%s670 + $0x20] sm:$0xf]
        %v680 = vld [vmem:[%s670 + $0x24] sm:$0xf]
        %v681 = vld [vmem:[%s670 + $0x28] sm:$0xf]
        %v682 = vld [vmem:[%s670 + $0x2c] sm:$0xf]
        %v683 = vld [vmem:[%s670 + $0x30] sm:$0xf]
        %v684 = vld [vmem:[%s670 + $0x34] sm:$0xf]
        %v685 = vld [vmem:[%s670 + $0x38] sm:$0xf]
        %v686 = vld [vmem:[%s670 + $0x3c] sm:$0xf]
        %v703 = vunpack.c.l.b16 %v671
        %v704 = vunpack.c.l.b16 %v672
        %v705 = vunpack.c.l.b16 %v673
        %v706 = vunpack.c.l.b16 %v674
        %v707 = vunpack.c.l.b16 %v675
        %v708 = vunpack.c.l.b16 %v676
        %v709 = vunpack.c.l.b16 %v677
        %v710 = vunpack.c.l.b16 %v678
        %v711 = vunpack.c.l.b16 %v679
        %v712 = vunpack.c.l.b16 %v680
        %v713 = vunpack.c.l.b16 %v681
        %v714 = vunpack.c.l.b16 %v682
        %v715 = vunpack.c.l.b16 %v683
        %v716 = vunpack.c.l.b16 %v684
        %v717 = vunpack.c.l.b16 %v685
        %v718 = vunpack.c.l.b16 %v686
        %v719 = vpack.c.b16 %v704, %v703
        %v720 = vpack.c.b16 %v706, %v705
        %v721 = vpack.c.b16 %v708, %v707
        %v722 = vpack.c.b16 %v710, %v709
        %v723 = vpack.c.b16 %v712, %v711
        %v724 = vpack.c.b16 %v714, %v713
        %v725 = vpack.c.b16 %v716, %v715
        %v726 = vpack.c.b16 %v718, %v717
        %735 = vmatprep.subr.bf16.mxu0 0
        %736 = vmatpush1.bf16.msra.mxu0 %v719
        %737 = vmatprep.subr.bf16.mxu0 0
        %738 = vmatpush1.bf16.msra.mxu0 %v720
        %739 = vmatprep.subr.bf16.mxu0 0
        %740 = vmatpush1.bf16.msra.mxu0 %v721
        %741 = vmatprep.subr.bf16.mxu0 0
        %742 = vmatpush1.bf16.msra.mxu0 %v722
        %743 = vmatprep.subr.bf16.mxu0 0
        %744 = vmatpush1.bf16.msra.mxu0 %v723
        %745 = vmatprep.subr.bf16.mxu0 0
        %746 = vmatpush1.bf16.msra.mxu0 %v724
        %747 = vmatprep.subr.bf16.mxu0 0
        %748 = vmatpush1.bf16.msra.mxu0 %v725
        %749 = vmatprep.subr.bf16.mxu0 0
        %750 = vmatpush1.bf16.msra.mxu0 %v726
        %751 = vmatprep.subr.bf16.mxu0 0
        %752 = vmatpush1.bf16.msra.mxu0 0
        %753 = vmatprep.subr.bf16.mxu0 0
        %754 = vmatpush1.bf16.msra.mxu0 0
        %755 = vmatprep.subr.bf16.mxu0 0
        %756 = vmatpush1.bf16.msra.mxu0 0
        %757 = vmatprep.subr.bf16.mxu0 0
        %758 = vmatpush1.bf16.msra.mxu0 0
        %759 = vmatprep.subr.bf16.mxu0 0
        %760 = vmatpush1.bf16.msra.mxu0 0
        %761 = vmatprep.subr.bf16.mxu0 0
        %762 = vmatpush1.bf16.msra.mxu0 0
        %763 = vmatprep.subr.bf16.mxu0 0
        %764 = vmatpush1.bf16.msra.mxu0 0
        %765 = vmatprep.subr.bf16.mxu0 0
        %766 = vmatpush1.bf16.msra.mxu0 0
        %767 = vmatprep.mubr.bf16.mxu0 0
        %768 = vmatmul.mubr.bf16.gmra.mrb[0].mxu0 %v668
        %v769 = vpop.f32.mrb[0].mxu0
        %v770 = vadd.f32 0.0, %v769
        %v771 = vpop.f32.mrb[0].mxu0
        %v772 = vpop.f32.mrb[0].mxu0
        %v773 = vadd.f32 0.0, %v772
        %v774 = vpop.f32.mrb[0].mxu0
        %775 = vmatprep.mubr.bf16.mxu0 0
        %776 = vmatmul.mubr.bf16.gmra.mrb[0].mxu0 %v669
        %v777 = vpop.f32.mrb[0].mxu0
        %v778 = vadd.f32 0.0, %v777
        %v779 = vpop.f32.mrb[0].mxu0
        %v780 = vpop.f32.mrb[0].mxu0
        %v781 = vadd.f32 0.0, %v780
        %v782 = vpop.f32.mrb[0].mxu0
        %783 = vdwg.mxu0
        %v784 = vld [vmem:[%s2 + $0x2] sm:$0x1]
        %v785 = vld [vmem:[%s3 + $0x2] sm:$0x1]
        %786 = vadd.xlane.f32.xlu0 %v770
        %v787 = vpop.xlane.xlu0 %786
        %788 = vadd.xlane.f32.xlu0 %v773
        %v789 = vpop.xlane.xlu0 %788
        %790 = vadd.xlane.f32.xlu0 %v778
        %v791 = vpop.xlane.xlu0 %790
        %792 = vadd.xlane.f32.xlu0 %v781
        %v793 = vpop.xlane.xlu0 %792
        %v794 = vmul.f32 %v787, %v430
        %v795 = vmul.f32 %v789, %v430
        %v796 = vmul.f32 %v791, %v430
        %v797 = vmul.f32 %v793, %v430
        %v798 = vsub.f32 %v770, %v794
        %v799 = vsub.f32 %v773, %v795
        %v800 = vsub.f32 %v778, %v796
        %v801 = vsub.f32 %v781, %v797
        %v802 = vmul.f32 %v798, %v798
        %v803 = vmul.f32 %v799, %v799
        %v804 = vmul.f32 %v800, %v800
        %v805 = vmul.f32 %v801, %v801
        %806 = vadd.xlane.f32.xlu0 %v802
        %v807 = vpop.xlane.xlu0 %806
        %808 = vadd.xlane.f32.xlu0 %v803
        %v809 = vpop.xlane.xlu0 %808
        %810 = vadd.xlane.f32.xlu0 %v804
        %v811 = vpop.xlane.xlu0 %810
        %812 = vadd.xlane.f32.xlu0 %v805
        %v813 = vpop.xlane.xlu0 %812
        %v814 = vmul.f32 %v807, %v430
        %v815 = vmul.f32 %v809, %v430
        %v816 = vmul.f32 %v811, %v430
        %v817 = vmul.f32 %v813, %v430
        %v818 = vadd.f32 %v814, 1e-05
        %v819 = vadd.f32 %v815, 1e-05
        %v820 = vadd.f32 %v816, 1e-05
        %v821 = vadd.f32 %v817, 1e-05
        %v822 = vrsqrt.pop %v818
        %v823 = vrsqrt.pop %v819
        %v824 = vrsqrt.pop %v820
        %v825 = vrsqrt.pop %v821
        %v826 = vmul.f32 %v798, %v822
        %v827 = vmul.f32 %v799, %v823
        %v828 = vmul.f32 %v800, %v824
        %v829 = vmul.f32 %v801, %v825
        %v830 = vlaneseq
        %v831 = vshrl.u32 %v830, 7
        %v832 = vsub.s32 0, %v831
        %v833 = vrot.slane %v784, %v832
        %v834 = vmul.f32 %v826, %v833
        %v835 = vmul.f32 %v827, %v833
        %v836 = vmul.f32 %v828, %v833
        %v837 = vmul.f32 %v829, %v833
        %v838 = vlaneseq
        %v839 = vshrl.u32 %v838, 7
        %v840 = vsub.s32 0, %v839
        %v841 = vrot.slane %v785, %v840
        %v842 = vadd.f32 %v834, %v841
        %v843 = vadd.f32 %v835, %v841
        %v844 = vadd.f32 %v836, %v841
        %v845 = vadd.f32 %v837, %v841
        %v846 = vmax.f32 %v842, 0.0
        %v847 = vmax.f32 %v843, 0.0
        %v848 = vmax.f32 %v844, 0.0
        %v849 = vmax.f32 %v845, 0.0
        %v850 = vpack.c.bf16 %v847, %v846
        %v851 = vpack.c.bf16 %v849, %v848
        %s852 = scalar_lea.vmem [#allocation2], 128
        %v853 = vld [vmem:[%s852] sm:$0xf]
        %v854 = vld [vmem:[%s852 + $0x4] sm:$0xf]
        %v855 = vld [vmem:[%s852 + $0x8] sm:$0xf]
        %v856 = vld [vmem:[%s852 + $0xc] sm:$0xf]
        %v857 = vld [vmem:[%s852 + $0x10] sm:$0xf]
        %v858 = vld [vmem:[%s852 + $0x14] sm:$0xf]
        %v859 = vld [vmem:[%s852 + $0x18] sm:$0xf]
        %v860 = vld [vmem:[%s852 + $0x1c] sm:$0xf]
        %v861 = vld [vmem:[%s852 + $0x20] sm:$0xf]
        %v862 = vld [vmem:[%s852 + $0x24] sm:$0xf]
        %v863 = vld [vmem:[%s852 + $0x28] sm:$0xf]
        %v864 = vld [vmem:[%s852 + $0x2c] sm:$0xf]
        %v865 = vld [vmem:[%s852 + $0x30] sm:$0xf]
        %v866 = vld [vmem:[%s852 + $0x34] sm:$0xf]
        %v867 = vld [vmem:[%s852 + $0x38] sm:$0xf]
        %v868 = vld [vmem:[%s852 + $0x3c] sm:$0xf]
        %v885 = vunpack.c.l.b16 %v853
        %v886 = vunpack.c.l.b16 %v854
        %v887 = vunpack.c.l.b16 %v855
        %v888 = vunpack.c.l.b16 %v856
        %v889 = vunpack.c.l.b16 %v857
        %v890 = vunpack.c.l.b16 %v858
        %v891 = vunpack.c.l.b16 %v859
        %v892 = vunpack.c.l.b16 %v860
        %v893 = vunpack.c.l.b16 %v861
        %v894 = vunpack.c.l.b16 %v862
        %v895 = vunpack.c.l.b16 %v863
        %v896 = vunpack.c.l.b16 %v864
        %v897 = vunpack.c.l.b16 %v865
        %v898 = vunpack.c.l.b16 %v866
        %v899 = vunpack.c.l.b16 %v867
        %v900 = vunpack.c.l.b16 %v868
        %v901 = vpack.c.b16 %v886, %v885
        %v902 = vpack.c.b16 %v888, %v887
        %v903 = vpack.c.b16 %v890, %v889
        %v904 = vpack.c.b16 %v892, %v891
        %v905 = vpack.c.b16 %v894, %v893
        %v906 = vpack.c.b16 %v896, %v895
        %v907 = vpack.c.b16 %v898, %v897
        %v908 = vpack.c.b16 %v900, %v899
        %917 = vmatprep.subr.bf16.mxu0 0
        %918 = vmatpush1.bf16.msra.mxu0 %v901
        %919 = vmatprep.subr.bf16.mxu0 0
        %920 = vmatpush1.bf16.msra.mxu0 %v902
        %921 = vmatprep.subr.bf16.mxu0 0
        %922 = vmatpush1.bf16.msra.mxu0 %v903
        %923 = vmatprep.subr.bf16.mxu0 0
        %924 = vmatpush1.bf16.msra.mxu0 %v904
        %925 = vmatprep.subr.bf16.mxu0 0
        %926 = vmatpush1.bf16.msra.mxu0 %v905
        %927 = vmatprep.subr.bf16.mxu0 0
        %928 = vmatpush1.bf16.msra.mxu0 %v906
        %929 = vmatprep.subr.bf16.mxu0 0
        %930 = vmatpush1.bf16.msra.mxu0 %v907
        %931 = vmatprep.subr.bf16.mxu0 0
        %932 = vmatpush1.bf16.msra.mxu0 %v908
        %933 = vmatprep.subr.bf16.mxu0 0
        %934 = vmatpush1.bf16.msra.mxu0 0
        %935 = vmatprep.subr.bf16.mxu0 0
        %936 = vmatpush1.bf16.msra.mxu0 0
        %937 = vmatprep.subr.bf16.mxu0 0
        %938 = vmatpush1.bf16.msra.mxu0 0
        %939 = vmatprep.subr.bf16.mxu0 0
        %940 = vmatpush1.bf16.msra.mxu0 0
        %941 = vmatprep.subr.bf16.mxu0 0
        %942 = vmatpush1.bf16.msra.mxu0 0
        %943 = vmatprep.subr.bf16.mxu0 0
        %944 = vmatpush1.bf16.msra.mxu0 0
        %945 = vmatprep.subr.bf16.mxu0 0
        %946 = vmatpush1.bf16.msra.mxu0 0
        %947 = vmatprep.subr.bf16.mxu0 0
        %948 = vmatpush1.bf16.msra.mxu0 0
        %949 = vmatprep.mubr.bf16.mxu0 0
        %950 = vmatmul.mubr.bf16.gmra.mrb[0].mxu0 %v850
        %v951 = vpop.f32.mrb[0].mxu0
        %v952 = vadd.f32 0.0, %v951
        %v953 = vpop.f32.mrb[0].mxu0
        %v954 = vpop.f32.mrb[0].mxu0
        %v955 = vadd.f32 0.0, %v954
        %v956 = vpop.f32.mrb[0].mxu0
        %957 = vmatprep.mubr.bf16.mxu0 0
        %958 = vmatmul.mubr.bf16.gmra.mrb[0].mxu0 %v851
        %v959 = vpop.f32.mrb[0].mxu0
        %v960 = vadd.f32 0.0, %v959
        %v961 = vpop.f32.mrb[0].mxu0
        %v962 = vpop.f32.mrb[0].mxu0
        %v963 = vadd.f32 0.0, %v962
        %v964 = vpop.f32.mrb[0].mxu0
        %965 = vdwg.mxu0
        %v966 = vld [vmem:[%s2 + $0x3] sm:$0x1]
        %v967 = vld [vmem:[%s3 + $0x3] sm:$0x1]
        %968 = vadd.xlane.f32.xlu0 %v952
        %v969 = vpop.xlane.xlu0 %968
        %970 = vadd.xlane.f32.xlu0 %v955
        %v971 = vpop.xlane.xlu0 %970
        %972 = vadd.xlane.f32.xlu0 %v960
        %v973 = vpop.xlane.xlu0 %972
        %974 = vadd.xlane.f32.xlu0 %v963
        %v975 = vpop.xlane.xlu0 %974
        %v976 = vmul.f32 %v969, %v430
        %v977 = vmul.f32 %v971, %v430
        %v978 = vmul.f32 %v973, %v430
        %v979 = vmul.f32 %v975, %v430
        %v980 = vsub.f32 %v952, %v976
        %v981 = vsub.f32 %v955, %v977
        %v982 = vsub.f32 %v960, %v978
        %v983 = vsub.f32 %v963, %v979
        %v984 = vmul.f32 %v980, %v980
        %v985 = vmul.f32 %v981, %v981
        %v986 = vmul.f32 %v982, %v982
        %v987 = vmul.f32 %v983, %v983
        %988 = vadd.xlane.f32.xlu0 %v984
        %v989 = vpop.xlane.xlu0 %988
        %990 = vadd.xlane.f32.xlu0 %v985
        %v991 = vpop.xlane.xlu0 %990
        %992 = vadd.xlane.f32.xlu0 %v986
        %v993 = vpop.xlane.xlu0 %992
        %994 = vadd.xlane.f32.xlu0 %v987
        %v995 = vpop.xlane.xlu0 %994
        %v996 = vmul.f32 %v989, %v430
        %v997 = vmul.f32 %v991, %v430
        %v998 = vmul.f32 %v993, %v430
        %v999 = vmul.f32 %v995, %v430
        %v1000 = vadd.f32 %v996, 1e-05
        %v1001 = vadd.f32 %v997, 1e-05
        %v1002 = vadd.f32 %v998, 1e-05
        %v1003 = vadd.f32 %v999, 1e-05
        %v1004 = vrsqrt.pop %v1000
        %v1005 = vrsqrt.pop %v1001
        %v1006 = vrsqrt.pop %v1002
        %v1007 = vrsqrt.pop %v1003
        %v1008 = vmul.f32 %v980, %v1004
        %v1009 = vmul.f32 %v981, %v1005
        %v1010 = vmul.f32 %v982, %v1006
        %v1011 = vmul.f32 %v983, %v1007
        %v1012 = vlaneseq
        %v1013 = vshrl.u32 %v1012, 7
        %v1014 = vsub.s32 0, %v1013
        %v1015 = vrot.slane %v966, %v1014
        %v1016 = vmul.f32 %v1008, %v1015
        %v1017 = vmul.f32 %v1009, %v1015
        %v1018 = vmul.f32 %v1010, %v1015
        %v1019 = vmul.f32 %v1011, %v1015
        %v1020 = vlaneseq
        %v1021 = vshrl.u32 %v1020, 7
        %v1022 = vsub.s32 0, %v1021
        %v1023 = vrot.slane %v967, %v1022
        %v1024 = vadd.f32 %v1016, %v1023
        %v1025 = vadd.f32 %v1017, %v1023
        %v1026 = vadd.f32 %v1018, %v1023
        %v1027 = vadd.f32 %v1019, %v1023
        %v1028 = vmax.f32 %v1024, 0.0
        %v1029 = vmax.f32 %v1025, 0.0
        %v1030 = vmax.f32 %v1026, 0.0
        %v1031 = vmax.f32 %v1027, 0.0
        %v1032 = vpack.c.bf16 %v1029, %v1028
        %v1033 = vpack.c.bf16 %v1031, %v1030
        %s1034 = scalar_lea.vmem [#allocation2], 192
        %v1035 = vld [vmem:[%s1034] sm:$0xf]
        %v1036 = vld [vmem:[%s1034 + $0x4] sm:$0xf]
        %v1037 = vld [vmem:[%s1034 + $0x8] sm:$0xf]
        %v1038 = vld [vmem:[%s1034 + $0xc] sm:$0xf]
        %v1039 = vld [vmem:[%s1034 + $0x10] sm:$0xf]
        %v1040 = vld [vmem:[%s1034 + $0x14] sm:$0xf]
        %v1041 = vld [vmem:[%s1034 + $0x18] sm:$0xf]
        %v1042 = vld [vmem:[%s1034 + $0x1c] sm:$0xf]
        %v1043 = vld [vmem:[%s1034 + $0x20] sm:$0xf]
        %v1044 = vld [vmem:[%s1034 + $0x24] sm:$0xf]
        %v1045 = vld [vmem:[%s1034 + $0x28] sm:$0xf]
        %v1046 = vld [vmem:[%s1034 + $0x2c] sm:$0xf]
        %v1047 = vld [vmem:[%s1034 + $0x30] sm:$0xf]
        %v1048 = vld [vmem:[%s1034 + $0x34] sm:$0xf]
        %v1049 = vld [vmem:[%s1034 + $0x38] sm:$0xf]
        %v1050 = vld [vmem:[%s1034 + $0x3c] sm:$0xf]
        %v1067 = vunpack.c.l.b16 %v1035
        %v1068 = vunpack.c.l.b16 %v1036
        %v1069 = vunpack.c.l.b16 %v1037
        %v1070 = vunpack.c.l.b16 %v1038
        %v1071 = vunpack.c.l.b16 %v1039
        %v1072 = vunpack.c.l.b16 %v1040
        %v1073 = vunpack.c.l.b16 %v1041
        %v1074 = vunpack.c.l.b16 %v1042
        %v1075 = vunpack.c.l.b16 %v1043
        %v1076 = vunpack.c.l.b16 %v1044
        %v1077 = vunpack.c.l.b16 %v1045
        %v1078 = vunpack.c.l.b16 %v1046
        %v1079 = vunpack.c.l.b16 %v1047
        %v1080 = vunpack.c.l.b16 %v1048
        %v1081 = vunpack.c.l.b16 %v1049
        %v1082 = vunpack.c.l.b16 %v1050
        %v1083 = vpack.c.b16 %v1068, %v1067
        %v1084 = vpack.c.b16 %v1070, %v1069
        %v1085 = vpack.c.b16 %v1072, %v1071
        %v1086 = vpack.c.b16 %v1074, %v1073
        %v1087 = vpack.c.b16 %v1076, %v1075
        %v1088 = vpack.c.b16 %v1078, %v1077
        %v1089 = vpack.c.b16 %v1080, %v1079
        %v1090 = vpack.c.b16 %v1082, %v1081
        %1099 = vmatprep.subr.bf16.mxu0 0
        %1100 = vmatpush1.bf16.msra.mxu0 %v1083
        %1101 = vmatprep.subr.bf16.mxu0 0
        %1102 = vmatpush1.bf16.msra.mxu0 %v1084
        %1103 = vmatprep.subr.bf16.mxu0 0
        %1104 = vmatpush1.bf16.msra.mxu0 %v1085
        %1105 = vmatprep.subr.bf16.mxu0 0
        %1106 = vmatpush1.bf16.msra.mxu0 %v1086
        %1107 = vmatprep.subr.bf16.mxu0 0
        %1108 = vmatpush1.bf16.msra.mxu0 %v1087
        %1109 = vmatprep.subr.bf16.mxu0 0
        %1110 = vmatpush1.bf16.msra.mxu0 %v1088
        %1111 = vmatprep.subr.bf16.mxu0 0
        %1112 = vmatpush1.bf16.msra.mxu0 %v1089
        %1113 = vmatprep.subr.bf16.mxu0 0
        %1114 = vmatpush1.bf16.msra.mxu0 %v1090
        %1115 = vmatprep.subr.bf16.mxu0 0
        %1116 = vmatpush1.bf16.msra.mxu0 0
        %1117 = vmatprep.subr.bf16.mxu0 0
        %1118 = vmatpush1.bf16.msra.mxu0 0
        %1119 = vmatprep.subr.bf16.mxu0 0
        %1120 = vmatpush1.bf16.msra.mxu0 0
        %1121 = vmatprep.subr.bf16.mxu0 0
        %1122 = vmatpush1.bf16.msra.mxu0 0
        %1123 = vmatprep.subr.bf16.mxu0 0
        %1124 = vmatpush1.bf16.msra.mxu0 0
        %1125 = vmatprep.subr.bf16.mxu0 0
        %1126 = vmatpush1.bf16.msra.mxu0 0
        %1127 = vmatprep.subr.bf16.mxu0 0
        %1128 = vmatpush1.bf16.msra.mxu0 0
        %1129 = vmatprep.subr.bf16.mxu0 0
        %1130 = vmatpush1.bf16.msra.mxu0 0
        %1131 = vmatprep.mubr.bf16.mxu0 0
        %1132 = vmatmul.mubr.bf16.gmra.mrb[0].mxu0 %v1032
        %v1133 = vpop.f32.mrb[0].mxu0
        %v1134 = vadd.f32 0.0, %v1133
        %v1135 = vpop.f32.mrb[0].mxu0
        %v1136 = vpop.f32.mrb[0].mxu0
        %v1137 = vadd.f32 0.0, %v1136
        %v1138 = vpop.f32.mrb[0].mxu0
        %1139 = vmatprep.mubr.bf16.mxu0 0
        %1140 = vmatmul.mubr.bf16.gmra.mrb[0].mxu0 %v1033
        %v1141 = vpop.f32.mrb[0].mxu0
        %v1142 = vadd.f32 0.0, %v1141
        %v1143 = vpop.f32.mrb[0].mxu0
        %v1144 = vpop.f32.mrb[0].mxu0
        %v1145 = vadd.f32 0.0, %v1144
        %v1146 = vpop.f32.mrb[0].mxu0
        %1147 = vdwg.mxu0
        %v1148 = vld [vmem:[%s2 + $0x4] sm:$0x1]
        %v1149 = vld [vmem:[%s3 + $0x4] sm:$0x1]
        %1150 = vadd.xlane.f32.xlu0 %v1134
        %v1151 = vpop.xlane.xlu0 %1150
        %1152 = vadd.xlane.f32.xlu0 %v1137
        %v1153 = vpop.xlane.xlu0 %1152
        %1154 = vadd.xlane.f32.xlu0 %v1142
        %v1155 = vpop.xlane.xlu0 %1154
        %1156 = vadd.xlane.f32.xlu0 %v1145
        %v1157 = vpop.xlane.xlu0 %1156
        %v1158 = vmul.f32 %v1151, %v430
        %v1159 = vmul.f32 %v1153, %v430
        %v1160 = vmul.f32 %v1155, %v430
        %v1161 = vmul.f32 %v1157, %v430
        %v1162 = vsub.f32 %v1134, %v1158
        %v1163 = vsub.f32 %v1137, %v1159
        %v1164 = vsub.f32 %v1142, %v1160
        %v1165 = vsub.f32 %v1145, %v1161
        %v1166 = vmul.f32 %v1162, %v1162
        %v1167 = vmul.f32 %v1163, %v1163
        %v1168 = vmul.f32 %v1164, %v1164
        %v1169 = vmul.f32 %v1165, %v1165
        %1170 = vadd.xlane.f32.xlu0 %v1166
        %v1171 = vpop.xlane.xlu0 %1170
        %1172 = vadd.xlane.f32.xlu0 %v1167
        %v1173 = vpop.xlane.xlu0 %1172
        %1174 = vadd.xlane.f32.xlu0 %v1168
        %v1175 = vpop.xlane.xlu0 %1174
        %1176 = vadd.xlane.f32.xlu0 %v1169
        %v1177 = vpop.xlane.xlu0 %1176
        %v1178 = vmul.f32 %v1171, %v430
        %v1179 = vmul.f32 %v1173, %v430
        %v1180 = vmul.f32 %v1175, %v430
        %v1181 = vmul.f32 %v1177, %v430
        %v1182 = vadd.f32 %v1178, 1e-05
        %v1183 = vadd.f32 %v1179, 1e-05
        %v1184 = vadd.f32 %v1180, 1e-05
        %v1185 = vadd.f32 %v1181, 1e-05
        %v1186 = vrsqrt.pop %v1182
        %v1187 = vrsqrt.pop %v1183
        %v1188 = vrsqrt.pop %v1184
        %v1189 = vrsqrt.pop %v1185
        %v1190 = vmul.f32 %v1162, %v1186
        %v1191 = vmul.f32 %v1163, %v1187
        %v1192 = vmul.f32 %v1164, %v1188
        %v1193 = vmul.f32 %v1165, %v1189
        %v1194 = vlaneseq
        %v1195 = vshrl.u32 %v1194, 7
        %v1196 = vsub.s32 0, %v1195
        %v1197 = vrot.slane %v1148, %v1196
        %v1198 = vmul.f32 %v1190, %v1197
        %v1199 = vmul.f32 %v1191, %v1197
        %v1200 = vmul.f32 %v1192, %v1197
        %v1201 = vmul.f32 %v1193, %v1197
        %v1202 = vlaneseq
        %v1203 = vshrl.u32 %v1202, 7
        %v1204 = vsub.s32 0, %v1203
        %v1205 = vrot.slane %v1149, %v1204
        %v1206 = vadd.f32 %v1198, %v1205
        %v1207 = vadd.f32 %v1199, %v1205
        %v1208 = vadd.f32 %v1200, %v1205
        %v1209 = vadd.f32 %v1201, %v1205
        %v1210 = vmax.f32 %v1206, 0.0
        %v1211 = vmax.f32 %v1207, 0.0
        %v1212 = vmax.f32 %v1208, 0.0
        %v1213 = vmax.f32 %v1209, 0.0
        %v1214 = vpack.c.bf16 %v1211, %v1210
        %v1215 = vpack.c.bf16 %v1213, %v1212
        %v1216 = vld [vmem:[%s5] sm:$0xf]
        %v1217 = vld [vmem:[%s5 + $0x4] sm:$0xf]
        %v1218 = vld [vmem:[%s5 + $0x8] sm:$0xf]
        %v1219 = vld [vmem:[%s5 + $0xc] sm:$0xf]
        %v1220 = vld [vmem:[%s5 + $0x10] sm:$0xf]
        %v1221 = vld [vmem:[%s5 + $0x14] sm:$0xf]
        %v1222 = vld [vmem:[%s5 + $0x18] sm:$0xf]
        %v1223 = vld [vmem:[%s5 + $0x1c] sm:$0xf]
        %v1224 = vld [vmem:[%s5 + $0x20] sm:$0xf]
        %v1225 = vld [vmem:[%s5 + $0x24] sm:$0xf]
        %v1226 = vld [vmem:[%s5 + $0x28] sm:$0xf]
        %v1227 = vld [vmem:[%s5 + $0x2c] sm:$0xf]
        %v1228 = vld [vmem:[%s5 + $0x30] sm:$0xf]
        %v1229 = vld [vmem:[%s5 + $0x34] sm:$0xf]
        %v1230 = vld [vmem:[%s5 + $0x38] sm:$0xf]
        %v1231 = vld [vmem:[%s5 + $0x3c] sm:$0xf]
        %v1232 = vld [vmem:[%s6] sm:$0x1]
        %v1234 = vlaneseq
        %v1235 = vshrl.u32 %v1234, 7
        %v1236 = vsub.s32 0, %v1235
        %v1237 = vrot.slane %v1232, %v1236
        %v1255 = vunpack.c.l.b16 %v1216
        %v1256 = vunpack.c.l.b16 %v1217
        %v1257 = vunpack.c.l.b16 %v1218
        %v1258 = vunpack.c.l.b16 %v1219
        %v1259 = vunpack.c.l.b16 %v1220
        %v1260 = vunpack.c.l.b16 %v1221
        %v1261 = vunpack.c.l.b16 %v1222
        %v1262 = vunpack.c.l.b16 %v1223
        %v1263 = vunpack.c.l.b16 %v1224
        %v1264 = vunpack.c.l.b16 %v1225
        %v1265 = vunpack.c.l.b16 %v1226
        %v1266 = vunpack.c.l.b16 %v1227
        %v1267 = vunpack.c.l.b16 %v1228
        %v1268 = vunpack.c.l.b16 %v1229
        %v1269 = vunpack.c.l.b16 %v1230
        %v1270 = vunpack.c.l.b16 %v1231
        %v1271 = vpack.c.b16 %v1256, %v1255
        %v1272 = vpack.c.b16 %v1258, %v1257
        %v1273 = vpack.c.b16 %v1260, %v1259
        %v1274 = vpack.c.b16 %v1262, %v1261
        %v1275 = vpack.c.b16 %v1264, %v1263
        %v1276 = vpack.c.b16 %v1266, %v1265
        %v1277 = vpack.c.b16 %v1268, %v1267
        %v1278 = vpack.c.b16 %v1270, %v1269
        %1287 = vmatprep.subr.bf16.mxu0 0
        %1288 = vmatpush1.bf16.msra.mxu0 %v1271
        %1289 = vmatprep.subr.bf16.mxu0 0
        %1290 = vmatpush1.bf16.msra.mxu0 %v1272
        %1291 = vmatprep.subr.bf16.mxu0 0
        %1292 = vmatpush1.bf16.msra.mxu0 %v1273
        %1293 = vmatprep.subr.bf16.mxu0 0
        %1294 = vmatpush1.bf16.msra.mxu0 %v1274
        %1295 = vmatprep.subr.bf16.mxu0 0
        %1296 = vmatpush1.bf16.msra.mxu0 %v1275
        %1297 = vmatprep.subr.bf16.mxu0 0
        %1298 = vmatpush1.bf16.msra.mxu0 %v1276
        %1299 = vmatprep.subr.bf16.mxu0 0
        %1300 = vmatpush1.bf16.msra.mxu0 %v1277
        %1301 = vmatprep.subr.bf16.mxu0 0
        %1302 = vmatpush1.bf16.msra.mxu0 %v1278
        %1303 = vmatprep.subr.bf16.mxu0 0
        %1304 = vmatpush1.bf16.msra.mxu0 0
        %1305 = vmatprep.subr.bf16.mxu0 0
        %1306 = vmatpush1.bf16.msra.mxu0 0
        %1307 = vmatprep.subr.bf16.mxu0 0
        %1308 = vmatpush1.bf16.msra.mxu0 0
        %1309 = vmatprep.subr.bf16.mxu0 0
        %1310 = vmatpush1.bf16.msra.mxu0 0
        %1311 = vmatprep.subr.bf16.mxu0 0
        %1312 = vmatpush1.bf16.msra.mxu0 0
        %1313 = vmatprep.subr.bf16.mxu0 0
        %1314 = vmatpush1.bf16.msra.mxu0 0
        %1315 = vmatprep.subr.bf16.mxu0 0
        %1316 = vmatpush1.bf16.msra.mxu0 0
        %1317 = vmatprep.subr.bf16.mxu0 0
        %1318 = vmatpush1.bf16.msra.mxu0 0
        %1319 = vmatprep.mubr.bf16.mxu0 0
        %1320 = vmatmul.mubr.bf16.gmra.mrb[0].mxu0 %v1214
        %v1321 = vpop.f32.mrb[0].mxu0
        %v1322 = vadd.f32 %v1237, %v1321
        %v1323 = vpop.f32.mrb[0].mxu0
        %v1324 = vpop.f32.mrb[0].mxu0
        %v1325 = vadd.f32 %v1237, %v1324
        %v1326 = vpop.f32.mrb[0].mxu0
        %1327 = vmatprep.mubr.bf16.mxu0 0
        %1328 = vmatmul.mubr.bf16.gmra.mrb[0].mxu0 %v1215
        %v1329 = vpop.f32.mrb[0].mxu0
        %v1330 = vadd.f32 %v1237, %v1329
        %v1331 = vpop.f32.mrb[0].mxu0
        %v1332 = vpop.f32.mrb[0].mxu0
        %v1333 = vadd.f32 %v1237, %v1332
        %v1334 = vpop.f32.mrb[0].mxu0
        %1335 = vdwg.mxu0
        %1336 = vst [vmem:[%s286] sm:$0xff] %v1322
        %1337 = vst [vmem:[%s286 + $0x8] sm:$0xff] %v1325
        %1338 = vst [vmem:[%s286 + $0x10] sm:$0xff] %v1330
        %1339 = vst [vmem:[%s286 + $0x18] sm:$0xff] %v1333
        %s1340 = sand.u32 %s182, 1
        %s1341 = scalar_lea.sflag [#allocation4], %s1340
        %s1342 = sand.u32 %s182, 1
        %s1343 = smul.addr %s1342, 32
        %s1344 = scalar_lea.vmem [#allocation5], %s1343
        // Predicated region
        $region53: #{tpu_custom_call.1} parent=47 // pred_check
          %p1345 = pneg %p192
        $region54: #{tpu_custom_call.1} parent=47 // pred_check_branch
          %1347 = sbr.rel (%p1345) target = $region56
        $region55: #{tpu_custom_call.1} parent=47 // pred_region
          %s1349 = ssub.s32 512, 512
          %1350 = vsyncadd %s1341, %s1349
          %s1351 = smul.addr %s22, 4
          %s1352 = smul.addr %s1351, 128
          %s1353 = scalar_lea.hbm %s7, %s1352
          %s1354 = sshll.u32 %s1344, 4
          %s1355 = int_to_ptr.vmem [resolvable:$true] %s1354
          %1360 = dma.vmem_to_hbm [thread:$0]  %s1355, 512, %s1353, %s1341, 128, 128, 8
        $region56: #{tpu_custom_call.1} parent=47 // pred_fallthru
          _
      $region48: #{tpu_custom_call.1} parent=5 // pred_fallthru
        _
      %p1361 = scmp.le.s32.totalorder 2, %s17
      // Predicated region
      $region57: #{tpu_custom_call.1} parent=5 // pred_check
        %p1362 = pneg %p1361
      $region58: #{tpu_custom_call.1} parent=5 // pred_check_branch
        %1364 = sbr.rel (%p1362) target = $region60
      $region59: #{tpu_custom_call.1} parent=5 // pred_region
        %s1365 = ssub.s32 %s17, 2
        // Predicated region
        $region61: #{tpu_custom_call.1} parent=59 // pred_check
          %p1366 = pneg %p198
        $region62: #{tpu_custom_call.1} parent=59 // pred_check_branch
          %1368 = sbr.rel (%p1366) target = $region64
        $region63: #{tpu_custom_call.1} parent=59 // pred_region
          %s1369 = sand.u32 %s183, 1
          %s1370 = scalar_lea.sflag [#allocation4], %s1369
          %s1371 = sand.u32 %s183, 1
          %s1372 = smul.addr %s1371, 32
          %s1373 = scalar_lea.vmem [#allocation5], %s1372
          %1374 = dma.done %s1370, 512
        $region64: #{tpu_custom_call.1} parent=59 // pred_fallthru
          _
      $region60: #{tpu_custom_call.1} parent=5 // pred_fallthru
        _
    $region6: #{tpu_custom_call.1} parent=1 // loop_footer
      %s21 = sadd.s32 1, %s17
    $region7: #{tpu_custom_call.1} parent=1 // loop_footer_branch
      %16 = sbr.rel target = $region3
    $region8: #{tpu_custom_call.1} parent=1 // loop_exit
      _
    %1375 = vsyncpa [#allocation3], 1
    %s1376 = scalar_lea.sflag [#allocation3], 1
    %1377 = vsyncpa %s1376, 1
    %1378 = vsyncpa [#allocation4], 1
    %s1379 = scalar_lea.sflag [#allocation4], 1
    %1380 = vsyncpa %s1379, 1

</llo_original>
